<compile_context>
chip_gen: v7x
topology: tpu7x:2x2x1
jax: 0.10.0
libtpu: 0.0.40
codegen_flags: <defaults>
</compile_context>

<pallas_src>
import jax
import jax.numpy as jnp
from jax.experimental import pallas as pl
from jax.experimental.pallas import tpu as pltpu


_LANE = 128   # lane quantum for feature / hidden / class dims
_ROW = 256    # row quantum: fills one 256-wide MXU pass on v6e/v7x (multiple of 8)


def _round_up(x, m):
    return (x + m - 1) // m * m


def _p1gcn_kernel(a_ref, x_ref, w1s_ref, w1n_ref, b1_ref,
                  w2s_ref, w2n_ref, b2_ref, o_ref):
    """Single fused step, everything resident in VMEM:
         H1 = relu(X @ W1_self + (A @ X) @ W1_nbr + b1)
         O  = H1 @ W2_self + (A @ H1) @ W2_nbr + b2
       Concat-free: each ConvolutionalLayer_1P is two dots summed.
    """
    a = a_ref[...]
    x = x_ref[...]

    # ---- layer 1 (ConvolutionalLayer_1P + ReLU) ----
    agg1 = jnp.dot(a, x, preferred_element_type=jnp.float32)            # (Np, C1p) f32
    h1 = (jnp.dot(x, w1s_ref[...], preferred_element_type=jnp.float32)
          + jnp.dot(agg1.astype(jnp.bfloat16), w1n_ref[...],
                    preferred_element_type=jnp.float32)
          + b1_ref[...])
    # TODO(synk): ptens.modules.Dropout(prob=0.5) is training-only; identity at eval.
    h1 = jnp.maximum(h1, 0.0).astype(jnp.bfloat16)                      # (Np, Hp) bf16
    # NOTE: padded rows (node index >= n) of h1 equal relu(b1) (nonzero).  This is
    # harmless ONLY because A's padded columns are zero (so they never feed agg2) and
    # padded output rows are stripped by the wrapper.  Keep that invariant.

    # ---- layer 2 (ConvolutionalLayer_1P, no activation) ----
    agg2 = jnp.dot(a, h1, preferred_element_type=jnp.float32)           # (Np, Hp) f32
    out = (jnp.dot(h1, w2s_ref[...], preferred_element_type=jnp.float32)
           + jnp.dot(agg2.astype(jnp.bfloat16), w2n_ref[...],
                     preferred_element_type=jnp.float32)
           + b2_ref[...])
    o_ref[...] = out.astype(o_ref.dtype)


def prepare_p1gcn_inputs(x, adj, params):
    """Pad + split + bf16-cast once, OUTSIDE the per-call forward (hoisted per review)."""
    n, c1 = x.shape
    hid = params["w1"].shape[1]
    c2 = params["w2"].shape[1]
    n_p = _round_up(n, _ROW)
    c1_p = _round_up(c1, _LANE)
    h_p = _round_up(hid, _LANE)
    c2_p = _round_up(c2, _LANE)

    # linmaps1: identity for singleton reference domains.
    x_p = jnp.zeros((n_p, c1_p), jnp.float32).at[:n, :c1].set(x).astype(jnp.bfloat16)
    # Mean normalization (1/deg) is applied in f32 before the bf16 cast.
    a_p = jnp.zeros((n_p, n_p), jnp.float32).at[:n, :n].set(adj).astype(jnp.bfloat16)

    def split_pad(w, b, cin_p, cout_p):
        cin = w.shape[0] // 2
        cout = w.shape[1]
        ws = (jnp.zeros((cin_p, cout_p), jnp.float32)
              .at[:cin, :cout].set(w[:cin]).astype(jnp.bfloat16))   # self term
        wn = (jnp.zeros((cin_p, cout_p), jnp.float32)
              .at[:cin, :cout].set(w[cin:]).astype(jnp.bfloat16))   # neighbor term
        bp = jnp.zeros((1, cout_p), jnp.float32).at[0, :cout].set(b)
        return ws, wn, bp

    w1s, w1n, b1 = split_pad(params["w1"], params["b1"], c1_p, h_p)
    w2s, w2n, b2 = split_pad(params["w2"], params["b2"], h_p, c2_p)
    return (a_p, x_p, w1s, w1n, b1, w2s, w2n, b2)


@jax.jit
def p1gcn_forward_padded(a_p, x_p, w1s, w1n, b1, w2s, w2n, b2):
    """Fused forward on pre-padded bf16 operands.  Returns padded (Np, C2p) f32 logits."""
    n_p = a_p.shape[0]
    c1_p = x_p.shape[1]
    h_p = w1s.shape[1]
    c2_p = w2s.shape[1]

    flops = (2 * n_p * n_p * c1_p + 4 * n_p * c1_p * h_p
             + 2 * n_p * n_p * h_p + 4 * n_p * h_p * c2_p)
    bytes_accessed = ((a_p.size + x_p.size + w1s.size + w1n.size
                       + w2s.size + w2n.size) * 2
                      + (b1.size + b2.size + n_p * c2_p) * 4)

    def full(shape):
        return pl.BlockSpec(shape, lambda i: (0, 0))

    return pl.pallas_call(
        _p1gcn_kernel,
        out_shape=jax.ShapeDtypeStruct((n_p, c2_p), jnp.float32),
        grid=(1,),  # single step: whole padded graph + both layers fused on-chip
        in_specs=[
            full((n_p, n_p)),      # A   (mean/sum message-passing matrix)
            full((n_p, c1_p)),     # X
            full((c1_p, h_p)),     # W1_self
            full((c1_p, h_p)),     # W1_nbr
            full((1, h_p)),        # b1
            full((h_p, c2_p)),     # W2_self
            full((h_p, c2_p)),     # W2_nbr
            full((1, c2_p)),       # b2
        ],
        out_specs=pl.BlockSpec((n_p, c2_p), lambda i: (0, 0)),
        compiler_params=pltpu.CompilerParams(
            dimension_semantics=("arbitrary",),
            vmem_limit_bytes=32 * 1024 * 1024,
        ),
        cost_estimate=pl.CostEstimate(
            flops=flops, transcendentals=0, bytes_accessed=bytes_accessed),
    )(a_p, x_p, w1s, w1n, b1, w2s, w2n, b2)


def p1gcn_forward(x, adj, params):
    """Convenience one-shot wrapper: prepare (pad/cast) + fused kernel + strip padding."""
    n = x.shape[0]
    c2 = params["w2"].shape[1]
    padded = prepare_p1gcn_inputs(x, adj, params)
    out_p = p1gcn_forward_padded(*padded)
    # linmaps0: sum over singleton reference domain == identity; strip padding.
    return out_p[:n, :c2]


def build_dense_adj(edge_index, num_nodes, reduction_type):
    """Dense message-passing matrix from edge_index (2, E): src -> dst."""
    src, dst = edge_index[0], edge_index[1]
    adj = jnp.zeros((num_nodes, num_nodes), jnp.float32)
    adj = adj.at[dst, src].add(1.0)
    if reduction_type == "mean":
        deg = adj.sum(axis=1, keepdims=True)
        adj = adj / jnp.maximum(deg, 1.0)
    return adj


def normalize_features(x):
    # pyg NormalizeFeatures: row-normalize so each node's features sum to 1.
    s = x.sum(axis=1, keepdims=True)
    return x / jnp.maximum(s, 1e-12)


def init_params(key, num_features, hidden_channels, num_classes):
    def glorot(k, fan_in, fan_out):
        limit = (6.0 / (fan_in + fan_out)) ** 0.5
        return jax.random.uniform(k, (fan_in, fan_out), jnp.float32, -limit, limit)

    k1, k2, k3, k4 = jax.random.split(key, 4)
    b1_lim = 1.0 / (2 * num_features) ** 0.5
    b2_lim = 1.0 / (2 * hidden_channels) ** 0.5
    return {
        "w1": glorot(k1, 2 * num_features, hidden_channels),
        "b1": jax.random.uniform(k3, (hidden_channels,), jnp.float32, -b1_lim, b1_lim),
        "w2": glorot(k2, 2 * hidden_channels, num_classes),
        "b2": jax.random.uniform(k4, (num_classes,), jnp.float32, -b2_lim, b2_lim),
    }


if __name__ == "__main__":
    # Small synthetic "Wisconsin-like" instance.
    NUM_NODES = 200       # padded to 256 inside prepare -> single 256-row MXU pass
    NUM_FEATURES = 64     # stands in for dataset.num_features (1703); padded to 128
    HIDDEN = 32           # padded to 128 lanes
    NUM_CLASSES = 5       # Wisconsin has 5 classes; padded to 128 lanes
    REDUCTION = "mean"

    key = jax.random.PRNGKey(0)
    kx, ke, kp = jax.random.split(key, 3)

    # Node features (non-negative, then row-normalized like NormalizeFeatures).
    x = jax.random.uniform(kx, (NUM_NODES, NUM_FEATURES), jnp.float32)
    x = normalize_features(x)

    # Deterministic small graph: a ring plus random extra directed edges.
    ring_src = jnp.arange(NUM_NODES, dtype=jnp.int32)
    ring_dst = (ring_src + 1) % NUM_NODES
    extra = jax.random.randint(ke, (2, 400), 0, NUM_NODES, dtype=jnp.int32)
    edge_index = jnp.concatenate([jnp.stack([ring_src, ring_dst]), extra], axis=1)

    adj = build_dense_adj(edge_index, NUM_NODES, REDUCTION)
    params = init_params(kp, NUM_FEATURES, HIDDEN, NUM_CLASSES)

    # Pad/cast once (hoisted out of the hot path), then run the fused kernel.
    padded = prepare_p1gcn_inputs(x, adj, params)
    out_p = p1gcn_forward_padded(*padded)
    jax.block_until_ready(out_p)
    out = out_p[:NUM_NODES, :NUM_CLASSES]

    # Pure-JAX f32 reference.
    def ref_layer(a, h_, w, b, relu):
        z = jnp.concatenate([h_, a @ h_], axis=1) @ w + b
        return jnp.maximum(z, 0.0) if relu else z

    ref = ref_layer(adj, x, params["w1"], params["b1"], True)
    ref = ref_layer(adj, ref, params["w2"], params["b2"], False)

    assert out.shape == (NUM_NODES, NUM_CLASSES)
    # Kernel uses bf16 MXU operands (A, X, W, H1) with f32 accumulation -> allow small
    # slack vs the pure-f32 reference.
    err = float(jnp.max(jnp.abs(out - ref)))
    assert err < 2e-2, f"max abs err {err}"

    print("KERNEL_OK")
</pallas_src>

<mosaic_0001>
module attributes {stable_mosaic.version = 11 : i64} {
  func.func @_p1gcn_kernel(%arg0: i32, %arg1: memref<256x256xbf16, #tpu.memory_space<vmem>>, %arg2: memref<256x128xbf16, #tpu.memory_space<vmem>>, %arg3: memref<128x128xbf16, #tpu.memory_space<vmem>>, %arg4: memref<128x128xbf16, #tpu.memory_space<vmem>>, %arg5: memref<1x128xf32, #tpu.memory_space<vmem>>, %arg6: memref<128x128xbf16, #tpu.memory_space<vmem>>, %arg7: memref<128x128xbf16, #tpu.memory_space<vmem>>, %arg8: memref<1x128xf32, #tpu.memory_space<vmem>>, %arg9: memref<256x128xf32, #tpu.memory_space<vmem>>) attributes {dimension_semantics = [#tpu.dimension_semantics<arbitrary>], iteration_bounds = array<i64: 1>, scalar_prefetch = 0 : i64, scratch_operands = 0 : i64, tpu.core_type = #tpu.core_type<tc>, window_params = [{pipeline_mode = #tpu.pipeline_mode<synchronous>, transform_indices = @transform_0, window_bounds = array<i64: 256, 256>}, {pipeline_mode = #tpu.pipeline_mode<synchronous>, transform_indices = @transform_1, window_bounds = array<i64: 256, 128>}, {pipeline_mode = #tpu.pipeline_mode<synchronous>, transform_indices = @transform_2, window_bounds = array<i64: 128, 128>}, {pipeline_mode = #tpu.pipeline_mode<synchronous>, transform_indices = @transform_3, window_bounds = array<i64: 128, 128>}, {pipeline_mode = #tpu.pipeline_mode<synchronous>, transform_indices = @transform_4, window_bounds = array<i64: 1, 128>}, {pipeline_mode = #tpu.pipeline_mode<synchronous>, transform_indices = @transform_5, window_bounds = array<i64: 128, 128>}, {pipeline_mode = #tpu.pipeline_mode<synchronous>, transform_indices = @transform_6, window_bounds = array<i64: 128, 128>}, {pipeline_mode = #tpu.pipeline_mode<synchronous>, transform_indices = @transform_7, window_bounds = array<i64: 1, 128>}, {pipeline_mode = #tpu.pipeline_mode<synchronous>, transform_indices = @transform_8, window_bounds = array<i64: 256, 128>}]} {
    %c0 = arith.constant 0 : index
    %c0_0 = arith.constant 0 : index
    %0 = vector.load %arg1[%c0, %c0_0] : memref<256x256xbf16, #tpu.memory_space<vmem>>, vector<256x256xbf16>
    %c0_1 = arith.constant 0 : index
    %c0_2 = arith.constant 0 : index
    %1 = vector.load %arg2[%c0_1, %c0_2] : memref<256x128xbf16, #tpu.memory_space<vmem>>, vector<256x128xbf16>
    %cst = arith.constant dense<0.000000e+00> : vector<256x128xf32>
    %2 = tpu.matmul %0, %1, %cst {dimension_numbers = #tpu.dot_dimension_numbers<[1], [0], [0], [1], [0, 0, 1, 1], [], []>} : vector<256x256xbf16>, vector<256x128xbf16>, vector<256x128xf32> -> vector<256x128xf32>
    %c0_3 = arith.constant 0 : index
    %c0_4 = arith.constant 0 : index
    %3 = vector.load %arg3[%c0_3, %c0_4] : memref<128x128xbf16, #tpu.memory_space<vmem>>, vector<128x128xbf16>
    %cst_5 = arith.constant dense<0.000000e+00> : vector<256x128xf32>
    %4 = tpu.matmul %1, %3, %cst_5 {dimension_numbers = #tpu.dot_dimension_numbers<[1], [0], [0], [1], [0, 0, 1, 1], [], []>} : vector<256x128xbf16>, vector<128x128xbf16>, vector<256x128xf32> -> vector<256x128xf32>
    %5 = arith.truncf %2 : vector<256x128xf32> to vector<256x128xbf16>
    %c0_6 = arith.constant 0 : index
    %c0_7 = arith.constant 0 : index
    %6 = vector.load %arg4[%c0_6, %c0_7] : memref<128x128xbf16, #tpu.memory_space<vmem>>, vector<128x128xbf16>
    %cst_8 = arith.constant dense<0.000000e+00> : vector<256x128xf32>
    %7 = tpu.matmul %5, %6, %cst_8 {dimension_numbers = #tpu.dot_dimension_numbers<[1], [0], [0], [1], [0, 0, 1, 1], [], []>} : vector<256x128xbf16>, vector<128x128xbf16>, vector<256x128xf32> -> vector<256x128xf32>
    %8 = arith.addf %4, %7 : vector<256x128xf32>
    %c0_9 = arith.constant 0 : index
    %c0_10 = arith.constant 0 : index
    %9 = vector.load %arg5[%c0_9, %c0_10] : memref<1x128xf32, #tpu.memory_space<vmem>>, vector<1x128xf32>
    %10 = vector.broadcast %9 : vector<1x128xf32> to vector<256x128xf32>
    %11 = arith.addf %8, %10 : vector<256x128xf32>
    %cst_11 = arith.constant 0.000000e+00 : f32
    %12 = vector.broadcast %cst_11 : f32 to vector<256x128xf32>
    %13 = arith.maximumf %11, %12 : vector<256x128xf32>
    %14 = arith.truncf %13 : vector<256x128xf32> to vector<256x128xbf16>
    %cst_12 = arith.constant dense<0.000000e+00> : vector<256x128xf32>
    %15 = tpu.matmul %0, %14, %cst_12 {dimension_numbers = #tpu.dot_dimension_numbers<[1], [0], [0], [1], [0, 0, 1, 1], [], []>} : vector<256x256xbf16>, vector<256x128xbf16>, vector<256x128xf32> -> vector<256x128xf32>
    %c0_13 = arith.constant 0 : index
    %c0_14 = arith.constant 0 : index
    %16 = vector.load %arg6[%c0_13, %c0_14] : memref<128x128xbf16, #tpu.memory_space<vmem>>, vector<128x128xbf16>
    %cst_15 = arith.constant dense<0.000000e+00> : vector<256x128xf32>
    %17 = tpu.matmul %14, %16, %cst_15 {dimension_numbers = #tpu.dot_dimension_numbers<[1], [0], [0], [1], [0, 0, 1, 1], [], []>} : vector<256x128xbf16>, vector<128x128xbf16>, vector<256x128xf32> -> vector<256x128xf32>
    %18 = arith.truncf %15 : vector<256x128xf32> to vector<256x128xbf16>
    %c0_16 = arith.constant 0 : index
    %c0_17 = arith.constant 0 : index
    %19 = vector.load %arg7[%c0_16, %c0_17] : memref<128x128xbf16, #tpu.memory_space<vmem>>, vector<128x128xbf16>
    %cst_18 = arith.constant dense<0.000000e+00> : vector<256x128xf32>
    %20 = tpu.matmul %18, %19, %cst_18 {dimension_numbers = #tpu.dot_dimension_numbers<[1], [0], [0], [1], [0, 0, 1, 1], [], []>} : vector<256x128xbf16>, vector<128x128xbf16>, vector<256x128xf32> -> vector<256x128xf32>
    %21 = arith.addf %17, %20 : vector<256x128xf32>
    %c0_19 = arith.constant 0 : index
    %c0_20 = arith.constant 0 : index
    %22 = vector.load %arg8[%c0_19, %c0_20] : memref<1x128xf32, #tpu.memory_space<vmem>>, vector<1x128xf32>
    %23 = vector.broadcast %22 : vector<1x128xf32> to vector<256x128xf32>
    %24 = arith.addf %21, %23 : vector<256x128xf32>
    %c0_21 = arith.constant 0 : index
    %c0_22 = arith.constant 0 : index
    %25 = vector.load %arg9[%c0_21, %c0_22] : memref<256x128xf32, #tpu.memory_space<vmem>>, vector<256x128xf32>
    tpu.vector_store %arg9[%c0_21, %c0_22], %24 {strides = array<i32>} : memref<256x128xf32, #tpu.memory_space<vmem>>, vector<256x128xf32>,
    return
  }
  func.func @transform_0(%arg0: i32) -> (i32, i32) {
    %c0_i32 = arith.constant 0 : i32
    %c0_i32_0 = arith.constant 0 : i32
    %c0_i32_1 = arith.constant 0 : i32
    return %c0_i32, %c0_i32_0 : i32, i32
  }
  func.func @transform_1(%arg0: i32) -> (i32, i32) {
    %c0_i32 = arith.constant 0 : i32
    %c0_i32_0 = arith.constant 0 : i32
    %c0_i32_1 = arith.constant 0 : i32
    return %c0_i32, %c0_i32_0 : i32, i32
  }
  func.func @transform_2(%arg0: i32) -> (i32, i32) {
    %c0_i32 = arith.constant 0 : i32
    %c0_i32_0 = arith.constant 0 : i32
    %c0_i32_1 = arith.constant 0 : i32
    return %c0_i32, %c0_i32_0 : i32, i32
  }
  func.func @transform_3(%arg0: i32) -> (i32, i32) {
    %c0_i32 = arith.constant 0 : i32
    %c0_i32_0 = arith.constant 0 : i32
    %c0_i32_1 = arith.constant 0 : i32
    return %c0_i32, %c0_i32_0 : i32, i32
  }
  func.func @transform_4(%arg0: i32) -> (i32, i32) {
    %c0_i32 = arith.constant 0 : i32
    %c0_i32_0 = arith.constant 0 : i32
    %c0_i32_1 = arith.constant 0 : i32
    return %c0_i32, %c0_i32_0 : i32, i32
  }
  func.func @transform_5(%arg0: i32) -> (i32, i32) {
    %c0_i32 = arith.constant 0 : i32
    %c0_i32_0 = arith.constant 0 : i32
    %c0_i32_1 = arith.constant 0 : i32
    return %c0_i32, %c0_i32_0 : i32, i32
  }
  func.func @transform_6(%arg0: i32) -> (i32, i32) {
    %c0_i32 = arith.constant 0 : i32
    %c0_i32_0 = arith.constant 0 : i32
    %c0_i32_1 = arith.constant 0 : i32
    return %c0_i32, %c0_i32_0 : i32, i32
  }
  func.func @transform_7(%arg0: i32) -> (i32, i32) {
    %c0_i32 = arith.constant 0 : i32
    %c0_i32_0 = arith.constant 0 : i32
    %c0_i32_1 = arith.constant 0 : i32
    return %c0_i32, %c0_i32_0 : i32, i32
  }
  func.func @transform_8(%arg0: i32) -> (i32, i32) {
    %c0_i32 = arith.constant 0 : i32
    %c0_i32_0 = arith.constant 0 : i32
    %c0_i32_1 = arith.constant 0 : i32
    return %c0_i32, %c0_i32_0 : i32, i32
  }
}

</mosaic_0001>

<llo_original>
// kernel: p1gcn_forward_padded.1
$region0: #{p1gcn_forward_padded.1}
  #allocation0 [shape = 'u32[]', space=smem, size = 0x4, offset = 0x4, fixed_abs, tag = 'smem constant byte address 0x4 - core index']
  #allocation1 [shape = 'u32[144,128]{1,0:T(1,128)}', space=vmem, size = 0x12000, scoped, tag = 'internal scratch']
  %s0 = inlined_call_operand.hbm [shape: bf16[256,256], index: 0, kind: input, shape index: {}]
  %s1 = inlined_call_operand.hbm [shape: bf16[256,128], index: 1, kind: input, shape index: {}]
  %s2 = inlined_call_operand.hbm [shape: bf16[128,128], index: 2, kind: input, shape index: {}]
  %s3 = inlined_call_operand.hbm [shape: bf16[128,128], index: 3, kind: input, shape index: {}]
  %s4 = inlined_call_operand.vmem [shape: f32[1,128], index: 4, kind: input, shape index: {}]
  %s5 = inlined_call_operand.hbm [shape: bf16[128,128], index: 5, kind: input, shape index: {}]
  %s6 = inlined_call_operand.hbm [shape: bf16[128,128], index: 6, kind: input, shape index: {}]
  %s7 = inlined_call_operand.vmem [shape: f32[1,128], index: 7, kind: input, shape index: {}]
  %s8 = inlined_call_operand.hbm [shape: f32[256,128], index: 8, kind: output, shape index: {}]
  %s9 = sld [smem:[#allocation0]]
  $region66: #{p1gcn_forward_padded.1} parent=0
    _
  %s11 = ssub.s32 1, %s9
  %s12 = scalar_select 0, %s11, %s9
  $region1: #{p1gcn_forward_padded.1} parent=0
    #allocation2 [shape = 'u8[131072]{0}', space=vmem, size = 0x20000, scoped, tag = 'input window, operand 0, single buffered']
    #allocation3 [shape = 's32[1]{0}', space=sflag, size = 0x4, scoped, tag = 'scoped memory for p1gcn_forward_padded.1']
    #allocation4 [shape = 's32[1]{0}', space=sflag, size = 0x4, scoped, tag = 'scoped memory for p1gcn_forward_padded.1']
    #allocation5 [shape = 'u8[65536]{0}', space=vmem, size = 0x10000, scoped, tag = 'input window, operand 1, single buffered']
    #allocation6 [shape = 's32[1]{0}', space=sflag, size = 0x4, scoped, tag = 'scoped memory for p1gcn_forward_padded.1']
    #allocation7 [shape = 'u8[32768]{0}', space=vmem, size = 0x8000, scoped, tag = 'input window, operand 2, single buffered']
    #allocation8 [shape = 'u8[32768]{0}', space=vmem, size = 0x8000, scoped, tag = 'input window, operand 3, single buffered']
    #allocation9 [shape = 's32[1]{0}', space=sflag, size = 0x4, scoped, tag = 'scoped memory for p1gcn_forward_padded.1']
    #allocation10 [shape = 'u8[32768]{0}', space=vmem, size = 0x8000, scoped, tag = 'input window, operand 5, single buffered']
    #allocation11 [shape = 'u8[32768]{0}', space=vmem, size = 0x8000, scoped, tag = 'input window, operand 6, single buffered']
    #allocation12 [shape = 's32[1]{0}', space=sflag, size = 0x4, scoped, tag = 'scoped memory for p1gcn_forward_padded.1']
    #allocation13 [shape = 'u8[131072]{0}', space=vmem, size = 0x20000, scoped, tag = 'output window, operand 0, single buffered']
    %13 = vsyncpa [#allocation3], 0
    %14 = vsyncpa [#allocation6], 0
    %15 = vsyncpa [#allocation9], 0
    %16 = vsyncpa [#allocation12], 0
    %17 = vsyncpa [#allocation4], 0
    // Predicated region
    $region2: #{p1gcn_forward_padded.1} parent=1 // pred_check
      _
    $region3: #{p1gcn_forward_padded.1} parent=1 // pred_check_branch
      %19 = sbr.rel (0) target = $region5
    $region4: #{p1gcn_forward_padded.1} parent=1 // pred_region
      %s21 = ssub.s32 4096, 4096
      %22 = vsyncadd [#allocation3], %s21
      %s23 = sshll.u32 [#allocation2], 4
      %s24 = int_to_ptr.vmem [resolvable:$true] %s23
      %29 = dma.hbm_to_vmem [thread:$0]  %s0, 4096, %s24, [#allocation3], 128, 128, 8
    $region5: #{p1gcn_forward_padded.1} parent=1 // pred_fallthru
      _
    // Predicated region
    $region6: #{p1gcn_forward_padded.1} parent=1 // pred_check
      _
    $region7: #{p1gcn_forward_padded.1} parent=1 // pred_check_branch
      %31 = sbr.rel (0) target = $region9
    $region8: #{p1gcn_forward_padded.1} parent=1 // pred_region
      %s33 = ssub.s32 2048, 2048
      %34 = vsyncadd [#allocation6], %s33
      %s35 = sshll.u32 [#allocation5], 4
      %s36 = int_to_ptr.vmem [resolvable:$true] %s35
      %41 = dma.hbm_to_vmem [thread:$0]  %s1, 2048, %s36, [#allocation6], 64, 64, 4
    $region9: #{p1gcn_forward_padded.1} parent=1 // pred_fallthru
      _
    // Predicated region
    $region10: #{p1gcn_forward_padded.1} parent=1 // pred_check
      _
    $region11: #{p1gcn_forward_padded.1} parent=1 // pred_check_branch
      %43 = sbr.rel (0) target = $region13
    $region12: #{p1gcn_forward_padded.1} parent=1 // pred_region
      %s45 = ssub.s32 1024, 1024
      %46 = vsyncadd [#allocation6], %s45
      %s47 = sshll.u32 [#allocation7], 4
      %s48 = int_to_ptr.vmem [resolvable:$true] %s47
      %53 = dma.hbm_to_vmem [thread:$0]  %s2, 1024, %s48, [#allocation6], 64, 64, 4
    $region13: #{p1gcn_forward_padded.1} parent=1 // pred_fallthru
      _
    // Predicated region
    $region14: #{p1gcn_forward_padded.1} parent=1 // pred_check
      _
    $region15: #{p1gcn_forward_padded.1} parent=1 // pred_check_branch
      %55 = sbr.rel (0) target = $region17
    $region16: #{p1gcn_forward_padded.1} parent=1 // pred_region
      %s57 = ssub.s32 1024, 1024
      %58 = vsyncadd [#allocation9], %s57
      %s59 = sshll.u32 [#allocation8], 4
      %s60 = int_to_ptr.vmem [resolvable:$true] %s59
      %65 = dma.hbm_to_vmem [thread:$0]  %s3, 1024, %s60, [#allocation9], 64, 64, 4
    $region17: #{p1gcn_forward_padded.1} parent=1 // pred_fallthru
      _
    // Predicated region
    $region18: #{p1gcn_forward_padded.1} parent=1 // pred_check
      _
    $region19: #{p1gcn_forward_padded.1} parent=1 // pred_check_branch
      %67 = sbr.rel (0) target = $region21
    $region20: #{p1gcn_forward_padded.1} parent=1 // pred_region
      _
    $region21: #{p1gcn_forward_padded.1} parent=1 // pred_fallthru
      _
    // Predicated region
    $region22: #{p1gcn_forward_padded.1} parent=1 // pred_check
      _
    $region23: #{p1gcn_forward_padded.1} parent=1 // pred_check_branch
      %69 = sbr.rel (0) target = $region25
    $region24: #{p1gcn_forward_padded.1} parent=1 // pred_region
      %s71 = ssub.s32 1024, 1024
      %72 = vsyncadd [#allocation9], %s71
      %s73 = sshll.u32 [#allocation10], 4
      %s74 = int_to_ptr.vmem [resolvable:$true] %s73
      %79 = dma.hbm_to_vmem [thread:$0]  %s5, 1024, %s74, [#allocation9], 64, 64, 4
    $region25: #{p1gcn_forward_padded.1} parent=1 // pred_fallthru
      _
    // Predicated region
    $region26: #{p1gcn_forward_padded.1} parent=1 // pred_check
      _
    $region27: #{p1gcn_forward_padded.1} parent=1 // pred_check_branch
      %81 = sbr.rel (0) target = $region29
    $region28: #{p1gcn_forward_padded.1} parent=1 // pred_region
      %s83 = ssub.s32 1024, 1024
      %84 = vsyncadd [#allocation12], %s83
      %s85 = sshll.u32 [#allocation11], 4
      %s86 = int_to_ptr.vmem [resolvable:$true] %s85
      %91 = dma.hbm_to_vmem [thread:$0]  %s6, 1024, %s86, [#allocation12], 64, 64, 4
    $region29: #{p1gcn_forward_padded.1} parent=1 // pred_fallthru
      _
    // Predicated region
    $region30: #{p1gcn_forward_padded.1} parent=1 // pred_check
      _
    $region31: #{p1gcn_forward_padded.1} parent=1 // pred_check_branch
      %93 = sbr.rel (0) target = $region33
    $region32: #{p1gcn_forward_padded.1} parent=1 // pred_region
      _
    $region33: #{p1gcn_forward_padded.1} parent=1 // pred_fallthru
      _
    // Predicated region
    $region34: #{p1gcn_forward_padded.1} parent=1 // pred_check
      _
    $region35: #{p1gcn_forward_padded.1} parent=1 // pred_check_branch
      %95 = sbr.rel (0) target = $region37
    $region36: #{p1gcn_forward_padded.1} parent=1 // pred_region
      %96 = dma.done [#allocation3], 4096
    $region37: #{p1gcn_forward_padded.1} parent=1 // pred_fallthru
      _
    // Predicated region
    $region38: #{p1gcn_forward_padded.1} parent=1 // pred_check
      _
    $region39: #{p1gcn_forward_padded.1} parent=1 // pred_check_branch
      %98 = sbr.rel (0) target = $region41
    $region40: #{p1gcn_forward_padded.1} parent=1 // pred_region
      %99 = dma.done [#allocation6], 2048
    $region41: #{p1gcn_forward_padded.1} parent=1 // pred_fallthru
      _
    // Predicated region
    $region42: #{p1gcn_forward_padded.1} parent=1 // pred_check
      _
    $region43: #{p1gcn_forward_padded.1} parent=1 // pred_check_branch
      %101 = sbr.rel (0) target = $region45
    $region44: #{p1gcn_forward_padded.1} parent=1 // pred_region
      %102 = dma.done [#allocation6], 1024
    $region45: #{p1gcn_forward_padded.1} parent=1 // pred_fallthru
      _
    // Predicated region
    $region46: #{p1gcn_forward_padded.1} parent=1 // pred_check
      _
    $region47: #{p1gcn_forward_padded.1} parent=1 // pred_check_branch
      %104 = sbr.rel (0) target = $region49
    $region48: #{p1gcn_forward_padded.1} parent=1 // pred_region
      %105 = dma.done [#allocation9], 1024
    $region49: #{p1gcn_forward_padded.1} parent=1 // pred_fallthru
      _
    // Predicated region
    $region50: #{p1gcn_forward_padded.1} parent=1 // pred_check
      _
    $region51: #{p1gcn_forward_padded.1} parent=1 // pred_check_branch
      %107 = sbr.rel (0) target = $region53
    $region52: #{p1gcn_forward_padded.1} parent=1 // pred_region
      %108 = dma.done [#allocation9], 1024
    $region53: #{p1gcn_forward_padded.1} parent=1 // pred_fallthru
      _
    // Predicated region
    $region54: #{p1gcn_forward_padded.1} parent=1 // pred_check
      _
    $region55: #{p1gcn_forward_padded.1} parent=1 // pred_check_branch
      %110 = sbr.rel (0) target = $region57
    $region56: #{p1gcn_forward_padded.1} parent=1 // pred_region
      %111 = dma.done [#allocation12], 1024
    $region57: #{p1gcn_forward_padded.1} parent=1 // pred_fallthru
      _
    %v113 = vld [vmem:[#allocation2] sm:$0xff]
    %v114 = vld [vmem:[#allocation2 + $0x8] sm:$0xff]
    %v115 = vld [vmem:[#allocation2 + $0x10] sm:$0xff]
    %v116 = vld [vmem:[#allocation2 + $0x18] sm:$0xff]
    %v117 = vld [vmem:[#allocation2 + $0x20] sm:$0xff]
    %v118 = vld [vmem:[#allocation2 + $0x28] sm:$0xff]
    %v119 = vld [vmem:[#allocation2 + $0x30] sm:$0xff]
    %v120 = vld [vmem:[#allocation2 + $0x38] sm:$0xff]
    %v121 = vld [vmem:[#allocation2 + $0x40] sm:$0xff]
    %v122 = vld [vmem:[#allocation2 + $0x48] sm:$0xff]
    %v123 = vld [vmem:[#allocation2 + $0x50] sm:$0xff]
    %v124 = vld [vmem:[#allocation2 + $0x58] sm:$0xff]
    %v125 = vld [vmem:[#allocation2 + $0x60] sm:$0xff]
    %v126 = vld [vmem:[#allocation2 + $0x68] sm:$0xff]
    %v127 = vld [vmem:[#allocation2 + $0x70] sm:$0xff]
    %v128 = vld [vmem:[#allocation2 + $0x78] sm:$0xff]
    %v129 = vld [vmem:[#allocation2 + $0x80] sm:$0xff]
    %v130 = vld [vmem:[#allocation2 + $0x88] sm:$0xff]
    %v131 = vld [vmem:[#allocation2 + $0x90] sm:$0xff]
    %v132 = vld [vmem:[#allocation2 + $0x98] sm:$0xff]
    %v133 = vld [vmem:[#allocation2 + $0xa0] sm:$0xff]
    %v134 = vld [vmem:[#allocation2 + $0xa8] sm:$0xff]
    %v135 = vld [vmem:[#allocation2 + $0xb0] sm:$0xff]
    %v136 = vld [vmem:[#allocation2 + $0xb8] sm:$0xff]
    %v137 = vld [vmem:[#allocation2 + $0xc0] sm:$0xff]
    %v138 = vld [vmem:[#allocation2 + $0xc8] sm:$0xff]
    %v139 = vld [vmem:[#allocation2 + $0xd0] sm:$0xff]
    %v140 = vld [vmem:[#allocation2 + $0xd8] sm:$0xff]
    %v141 = vld [vmem:[#allocation2 + $0xe0] sm:$0xff]
    %v142 = vld [vmem:[#allocation2 + $0xe8] sm:$0xff]
    %v143 = vld [vmem:[#allocation2 + $0xf0] sm:$0xff]
    %v144 = vld [vmem:[#allocation2 + $0xf8] sm:$0xff]
    %v145 = vld [vmem:[#allocation5] sm:$0xf]
    %v146 = vld [vmem:[#allocation5 + $0x4] sm:$0xf]
    %v147 = vld [vmem:[#allocation5 + $0x8] sm:$0xf]
    %v148 = vld [vmem:[#allocation5 + $0xc] sm:$0xf]
    %v149 = vld [vmem:[#allocation5 + $0x10] sm:$0xf]
    %v150 = vld [vmem:[#allocation5 + $0x14] sm:$0xf]
    %v151 = vld [vmem:[#allocation5 + $0x18] sm:$0xf]
    %v152 = vld [vmem:[#allocation5 + $0x1c] sm:$0xf]
    %v153 = vld [vmem:[#allocation5 + $0x20] sm:$0xf]
    %v154 = vld [vmem:[#allocation5 + $0x24] sm:$0xf]
    %v155 = vld [vmem:[#allocation5 + $0x28] sm:$0xf]
    %v156 = vld [vmem:[#allocation5 + $0x2c] sm:$0xf]
    %v157 = vld [vmem:[#allocation5 + $0x30] sm:$0xf]
    %v158 = vld [vmem:[#allocation5 + $0x34] sm:$0xf]
    %v159 = vld [vmem:[#allocation5 + $0x38] sm:$0xf]
    %v160 = vld [vmem:[#allocation5 + $0x3c] sm:$0xf]
    %v161 = vld [vmem:[#allocation5 + $0x40] sm:$0xf]
    %v162 = vld [vmem:[#allocation5 + $0x44] sm:$0xf]
    %v163 = vld [vmem:[#allocation5 + $0x48] sm:$0xf]
    %v164 = vld [vmem:[#allocation5 + $0x4c] sm:$0xf]
    %v165 = vld [vmem:[#allocation5 + $0x50] sm:$0xf]
    %v166 = vld [vmem:[#allocation5 + $0x54] sm:$0xf]
    %v167 = vld [vmem:[#allocation5 + $0x58] sm:$0xf]
    %v168 = vld [vmem:[#allocation5 + $0x5c] sm:$0xf]
    %v169 = vld [vmem:[#allocation5 + $0x60] sm:$0xf]
    %v170 = vld [vmem:[#allocation5 + $0x64] sm:$0xf]
    %v171 = vld [vmem:[#allocation5 + $0x68] sm:$0xf]
    %v172 = vld [vmem:[#allocation5 + $0x6c] sm:$0xf]
    %v173 = vld [vmem:[#allocation5 + $0x70] sm:$0xf]
    %v174 = vld [vmem:[#allocation5 + $0x74] sm:$0xf]
    %v175 = vld [vmem:[#allocation5 + $0x78] sm:$0xf]
    %v176 = vld [vmem:[#allocation5 + $0x7c] sm:$0xf]
    %v209 = vunpack.c.l.b16 %v113
    %v210 = vunpack.c.h.b16 %v113
    %v211 = vunpack.c.l.b16 %v114
    %v212 = vunpack.c.h.b16 %v114
    %v213 = vunpack.c.l.b16 %v115
    %v214 = vunpack.c.h.b16 %v115
    %v215 = vunpack.c.l.b16 %v116
    %v216 = vunpack.c.h.b16 %v116
    %v217 = vunpack.c.l.b16 %v117
    %v218 = vunpack.c.h.b16 %v117
    %v219 = vunpack.c.l.b16 %v118
    %v220 = vunpack.c.h.b16 %v118
    %v221 = vunpack.c.l.b16 %v119
    %v222 = vunpack.c.h.b16 %v119
    %v223 = vunpack.c.l.b16 %v120
    %v224 = vunpack.c.h.b16 %v120
    %v225 = vunpack.c.l.b16 %v121
    %v226 = vunpack.c.h.b16 %v121
    %v227 = vunpack.c.l.b16 %v122
    %v228 = vunpack.c.h.b16 %v122
    %v229 = vunpack.c.l.b16 %v123
    %v230 = vunpack.c.h.b16 %v123
    %v231 = vunpack.c.l.b16 %v124
    %v232 = vunpack.c.h.b16 %v124
    %v233 = vunpack.c.l.b16 %v125
    %v234 = vunpack.c.h.b16 %v125
    %v235 = vunpack.c.l.b16 %v126
    %v236 = vunpack.c.h.b16 %v126
    %v237 = vunpack.c.l.b16 %v127
    %v238 = vunpack.c.h.b16 %v127
    %v239 = vunpack.c.l.b16 %v128
    %v240 = vunpack.c.h.b16 %v128
    %v241 = vunpack.c.l.b16 %v129
    %v242 = vunpack.c.h.b16 %v129
    %v243 = vunpack.c.l.b16 %v130
    %v244 = vunpack.c.h.b16 %v130
    %v245 = vunpack.c.l.b16 %v131
    %v246 = vunpack.c.h.b16 %v131
    %v247 = vunpack.c.l.b16 %v132
    %v248 = vunpack.c.h.b16 %v132
    %v249 = vunpack.c.l.b16 %v133
    %v250 = vunpack.c.h.b16 %v133
    %v251 = vunpack.c.l.b16 %v134
    %v252 = vunpack.c.h.b16 %v134
    %v253 = vunpack.c.l.b16 %v135
    %v254 = vunpack.c.h.b16 %v135
    %v255 = vunpack.c.l.b16 %v136
    %v256 = vunpack.c.h.b16 %v136
    %v257 = vunpack.c.l.b16 %v137
    %v258 = vunpack.c.h.b16 %v137
    %v259 = vunpack.c.l.b16 %v138
    %v260 = vunpack.c.h.b16 %v138
    %v261 = vunpack.c.l.b16 %v139
    %v262 = vunpack.c.h.b16 %v139
    %v263 = vunpack.c.l.b16 %v140
    %v264 = vunpack.c.h.b16 %v140
    %v265 = vunpack.c.l.b16 %v141
    %v266 = vunpack.c.h.b16 %v141
    %v267 = vunpack.c.l.b16 %v142
    %v268 = vunpack.c.h.b16 %v142
    %v269 = vunpack.c.l.b16 %v143
    %v270 = vunpack.c.h.b16 %v143
    %v271 = vunpack.c.l.b16 %v144
    %v272 = vunpack.c.h.b16 %v144
    %v273 = vpack.c.b16 %v211, %v209
    %v274 = vpack.c.b16 %v212, %v210
    %v275 = vpack.c.b16 %v215, %v213
    %v276 = vpack.c.b16 %v216, %v214
    %v277 = vpack.c.b16 %v219, %v217
    %v278 = vpack.c.b16 %v220, %v218
    %v279 = vpack.c.b16 %v223, %v221
    %v280 = vpack.c.b16 %v224, %v222
    %v281 = vpack.c.b16 %v227, %v225
    %v282 = vpack.c.b16 %v228, %v226
    %v283 = vpack.c.b16 %v231, %v229
    %v284 = vpack.c.b16 %v232, %v230
    %v285 = vpack.c.b16 %v235, %v233
    %v286 = vpack.c.b16 %v236, %v234
    %v287 = vpack.c.b16 %v239, %v237
    %v288 = vpack.c.b16 %v240, %v238
    %v289 = vpack.c.b16 %v243, %v241
    %v290 = vpack.c.b16 %v244, %v242
    %v291 = vpack.c.b16 %v247, %v245
    %v292 = vpack.c.b16 %v248, %v246
    %v293 = vpack.c.b16 %v251, %v249
    %v294 = vpack.c.b16 %v252, %v250
    %v295 = vpack.c.b16 %v255, %v253
    %v296 = vpack.c.b16 %v256, %v254
    %v297 = vpack.c.b16 %v259, %v257
    %v298 = vpack.c.b16 %v260, %v258
    %v299 = vpack.c.b16 %v263, %v261
    %v300 = vpack.c.b16 %v264, %v262
    %v301 = vpack.c.b16 %v267, %v265
    %v302 = vpack.c.b16 %v268, %v266
    %v303 = vpack.c.b16 %v271, %v269
    %v304 = vpack.c.b16 %v272, %v270
    %v369 = vunpack.c.l.b16 %v145
    %v370 = vunpack.c.l.b16 %v146
    %v371 = vunpack.c.l.b16 %v147
    %v372 = vunpack.c.l.b16 %v148
    %v373 = vunpack.c.l.b16 %v149
    %v374 = vunpack.c.l.b16 %v150
    %v375 = vunpack.c.l.b16 %v151
    %v376 = vunpack.c.l.b16 %v152
    %v377 = vunpack.c.l.b16 %v153
    %v378 = vunpack.c.l.b16 %v154
    %v379 = vunpack.c.l.b16 %v155
    %v380 = vunpack.c.l.b16 %v156
    %v381 = vunpack.c.l.b16 %v157
    %v382 = vunpack.c.l.b16 %v158
    %v383 = vunpack.c.l.b16 %v159
    %v384 = vunpack.c.l.b16 %v160
    %v385 = vunpack.c.l.b16 %v161
    %v386 = vunpack.c.l.b16 %v162
    %v387 = vunpack.c.l.b16 %v163
    %v388 = vunpack.c.l.b16 %v164
    %v389 = vunpack.c.l.b16 %v165
    %v390 = vunpack.c.l.b16 %v166
    %v391 = vunpack.c.l.b16 %v167
    %v392 = vunpack.c.l.b16 %v168
    %v393 = vunpack.c.l.b16 %v169
    %v394 = vunpack.c.l.b16 %v170
    %v395 = vunpack.c.l.b16 %v171
    %v396 = vunpack.c.l.b16 %v172
    %v397 = vunpack.c.l.b16 %v173
    %v398 = vunpack.c.l.b16 %v174
    %v399 = vunpack.c.l.b16 %v175
    %v400 = vunpack.c.l.b16 %v176
    %v401 = vpack.c.b16 %v370, %v369
    %v402 = vpack.c.b16 %v372, %v371
    %v403 = vpack.c.b16 %v374, %v373
    %v404 = vpack.c.b16 %v376, %v375
    %v405 = vpack.c.b16 %v378, %v377
    %v406 = vpack.c.b16 %v380, %v379
    %v407 = vpack.c.b16 %v382, %v381
    %v408 = vpack.c.b16 %v384, %v383
    %v409 = vpack.c.b16 %v386, %v385
    %v410 = vpack.c.b16 %v388, %v387
    %v411 = vpack.c.b16 %v390, %v389
    %v412 = vpack.c.b16 %v392, %v391
    %v413 = vpack.c.b16 %v394, %v393
    %v414 = vpack.c.b16 %v396, %v395
    %v415 = vpack.c.b16 %v398, %v397
    %v416 = vpack.c.b16 %v400, %v399
    %433 = vmatprep.subr.bf16.mxu0 0
    %434 = vmatpush1.bf16.msra.mxu0 %v401
    %435 = vmatprep.subr.bf16.mxu0 0
    %436 = vmatpush1.bf16.msra.mxu0 %v402
    %437 = vmatprep.subr.bf16.mxu0 0
    %438 = vmatpush1.bf16.msra.mxu0 %v403
    %439 = vmatprep.subr.bf16.mxu0 0
    %440 = vmatpush1.bf16.msra.mxu0 %v404
    %441 = vmatprep.subr.bf16.mxu0 0
    %442 = vmatpush1.bf16.msra.mxu0 %v405
    %443 = vmatprep.subr.bf16.mxu0 0
    %444 = vmatpush1.bf16.msra.mxu0 %v406
    %445 = vmatprep.subr.bf16.mxu0 0
    %446 = vmatpush1.bf16.msra.mxu0 %v407
    %447 = vmatprep.subr.bf16.mxu0 0
    %448 = vmatpush1.bf16.msra.mxu0 %v408
    %449 = vmatprep.subr.bf16.mxu0 0
    %450 = vmatpush1.bf16.msra.mxu0 %v409
    %451 = vmatprep.subr.bf16.mxu0 0
    %452 = vmatpush1.bf16.msra.mxu0 %v410
    %453 = vmatprep.subr.bf16.mxu0 0
    %454 = vmatpush1.bf16.msra.mxu0 %v411
    %455 = vmatprep.subr.bf16.mxu0 0
    %456 = vmatpush1.bf16.msra.mxu0 %v412
    %457 = vmatprep.subr.bf16.mxu0 0
    %458 = vmatpush1.bf16.msra.mxu0 %v413
    %459 = vmatprep.subr.bf16.mxu0 0
    %460 = vmatpush1.bf16.msra.mxu0 %v414
    %461 = vmatprep.subr.bf16.mxu0 0
    %462 = vmatpush1.bf16.msra.mxu0 %v415
    %463 = vmatprep.subr.bf16.mxu0 0
    %464 = vmatpush1.bf16.msra.mxu0 %v416
    %465 = vmatprep.mubr.bf16.mxu0 %v274
    %466 = vmatmul.mubr.bf16.gmra.mrb[0].mxu0 %v273
    %v467 = vpop.f32.mrb[0].mxu0
    %v468 = vadd.f32 0.0, %v467
    %v469 = vpop.f32.mrb[0].mxu0
    %v470 = vpop.f32.mrb[0].mxu0
    %v471 = vadd.f32 0.0, %v470
    %v472 = vpop.f32.mrb[0].mxu0
    %473 = vmatprep.mubr.bf16.mxu0 %v276
    %474 = vmatmul.mubr.bf16.gmra.mrb[0].mxu0 %v275
    %v475 = vpop.f32.mrb[0].mxu0
    %v476 = vadd.f32 0.0, %v475
    %v477 = vpop.f32.mrb[0].mxu0
    %v478 = vpop.f32.mrb[0].mxu0
    %v479 = vadd.f32 0.0, %v478
    %v480 = vpop.f32.mrb[0].mxu0
    %481 = vmatprep.mubr.bf16.mxu0 %v278
    %482 = vmatmul.mubr.bf16.gmra.mrb[0].mxu0 %v277
    %v483 = vpop.f32.mrb[0].mxu0
    %v484 = vadd.f32 0.0, %v483
    %v485 = vpop.f32.mrb[0].mxu0
    %v486 = vpop.f32.mrb[0].mxu0
    %v487 = vadd.f32 0.0, %v486
    %v488 = vpop.f32.mrb[0].mxu0
    %489 = vmatprep.mubr.bf16.mxu0 %v280
    %490 = vmatmul.mubr.bf16.gmra.mrb[0].mxu0 %v279
    %v491 = vpop.f32.mrb[0].mxu0
    %v492 = vadd.f32 0.0, %v491
    %v493 = vpop.f32.mrb[0].mxu0
    %v494 = vpop.f32.mrb[0].mxu0
    %v495 = vadd.f32 0.0, %v494
    %v496 = vpop.f32.mrb[0].mxu0
    %497 = vmatprep.mubr.bf16.mxu0 %v282
    %498 = vmatmul.mubr.bf16.gmra.mrb[0].mxu0 %v281
    %v499 = vpop.f32.mrb[0].mxu0
    %v500 = vadd.f32 0.0, %v499
    %v501 = vpop.f32.mrb[0].mxu0
    %v502 = vpop.f32.mrb[0].mxu0
    %v503 = vadd.f32 0.0, %v502
    %v504 = vpop.f32.mrb[0].mxu0
    %505 = vmatprep.mubr.bf16.mxu0 %v284
    %506 = vmatmul.mubr.bf16.gmra.mrb[0].mxu0 %v283
    %v507 = vpop.f32.mrb[0].mxu0
    %v508 = vadd.f32 0.0, %v507
    %v509 = vpop.f32.mrb[0].mxu0
    %v510 = vpop.f32.mrb[0].mxu0
    %v511 = vadd.f32 0.0, %v510
    %v512 = vpop.f32.mrb[0].mxu0
    %513 = vmatprep.mubr.bf16.mxu0 %v286
    %514 = vmatmul.mubr.bf16.gmra.mrb[0].mxu0 %v285
    %v515 = vpop.f32.mrb[0].mxu0
    %v516 = vadd.f32 0.0, %v515
    %v517 = vpop.f32.mrb[0].mxu0
    %v518 = vpop.f32.mrb[0].mxu0
    %v519 = vadd.f32 0.0, %v518
    %v520 = vpop.f32.mrb[0].mxu0
    %521 = vmatprep.mubr.bf16.mxu0 %v288
    %522 = vmatmul.mubr.bf16.gmra.mrb[0].mxu0 %v287
    %v523 = vpop.f32.mrb[0].mxu0
    %v524 = vadd.f32 0.0, %v523
    %v525 = vpop.f32.mrb[0].mxu0
    %v526 = vpop.f32.mrb[0].mxu0
    %v527 = vadd.f32 0.0, %v526
    %v528 = vpop.f32.mrb[0].mxu0
    %529 = vmatprep.mubr.bf16.mxu0 %v290
    %530 = vmatmul.mubr.bf16.gmra.mrb[0].mxu0 %v289
    %v531 = vpop.f32.mrb[0].mxu0
    %v532 = vadd.f32 0.0, %v531
    %v533 = vpop.f32.mrb[0].mxu0
    %v534 = vpop.f32.mrb[0].mxu0
    %v535 = vadd.f32 0.0, %v534
    %v536 = vpop.f32.mrb[0].mxu0
    %537 = vmatprep.mubr.bf16.mxu0 %v292
    %538 = vmatmul.mubr.bf16.gmra.mrb[0].mxu0 %v291
    %v539 = vpop.f32.mrb[0].mxu0
    %v540 = vadd.f32 0.0, %v539
    %v541 = vpop.f32.mrb[0].mxu0
    %v542 = vpop.f32.mrb[0].mxu0
    %v543 = vadd.f32 0.0, %v542
    %v544 = vpop.f32.mrb[0].mxu0
    %545 = vmatprep.mubr.bf16.mxu0 %v294
    %546 = vmatmul.mubr.bf16.gmra.mrb[0].mxu0 %v293
    %v547 = vpop.f32.mrb[0].mxu0
    %v548 = vadd.f32 0.0, %v547
    %v549 = vpop.f32.mrb[0].mxu0
    %v550 = vpop.f32.mrb[0].mxu0
    %v551 = vadd.f32 0.0, %v550
    %v552 = vpop.f32.mrb[0].mxu0
    %553 = vmatprep.mubr.bf16.mxu0 %v296
    %554 = vmatmul.mubr.bf16.gmra.mrb[0].mxu0 %v295
    %v555 = vpop.f32.mrb[0].mxu0
    %v556 = vadd.f32 0.0, %v555
    %v557 = vpop.f32.mrb[0].mxu0
    %v558 = vpop.f32.mrb[0].mxu0
    %v559 = vadd.f32 0.0, %v558
    %v560 = vpop.f32.mrb[0].mxu0
    %561 = vmatprep.mubr.bf16.mxu0 %v298
    %562 = vmatmul.mubr.bf16.gmra.mrb[0].mxu0 %v297
    %v563 = vpop.f32.mrb[0].mxu0
    %v564 = vadd.f32 0.0, %v563
    %v565 = vpop.f32.mrb[0].mxu0
    %v566 = vpop.f32.mrb[0].mxu0
    %v567 = vadd.f32 0.0, %v566
    %v568 = vpop.f32.mrb[0].mxu0
    %569 = vmatprep.mubr.bf16.mxu0 %v300
    %570 = vmatmul.mubr.bf16.gmra.mrb[0].mxu0 %v299
    %v571 = vpop.f32.mrb[0].mxu0
    %v572 = vadd.f32 0.0, %v571
    %v573 = vpop.f32.mrb[0].mxu0
    %v574 = vpop.f32.mrb[0].mxu0
    %v575 = vadd.f32 0.0, %v574
    %v576 = vpop.f32.mrb[0].mxu0
    %577 = vmatprep.mubr.bf16.mxu0 %v302
    %578 = vmatmul.mubr.bf16.gmra.mrb[0].mxu0 %v301
    %v579 = vpop.f32.mrb[0].mxu0
    %v580 = vadd.f32 0.0, %v579
    %v581 = vpop.f32.mrb[0].mxu0
    %v582 = vpop.f32.mrb[0].mxu0
    %v583 = vadd.f32 0.0, %v582
    %v584 = vpop.f32.mrb[0].mxu0
    %585 = vmatprep.mubr.bf16.mxu0 %v304
    %586 = vmatmul.mubr.bf16.gmra.mrb[0].mxu0 %v303
    %v587 = vpop.f32.mrb[0].mxu0
    %v588 = vadd.f32 0.0, %v587
    %v589 = vpop.f32.mrb[0].mxu0
    %v590 = vpop.f32.mrb[0].mxu0
    %v591 = vadd.f32 0.0, %v590
    %v592 = vpop.f32.mrb[0].mxu0
    %593 = vdwg.mxu0
    %v594 = vld [vmem:[#allocation7] sm:$0xf]
    %v595 = vld [vmem:[#allocation7 + $0x4] sm:$0xf]
    %v596 = vld [vmem:[#allocation7 + $0x8] sm:$0xf]
    %v597 = vld [vmem:[#allocation7 + $0xc] sm:$0xf]
    %v598 = vld [vmem:[#allocation7 + $0x10] sm:$0xf]
    %v599 = vld [vmem:[#allocation7 + $0x14] sm:$0xf]
    %v600 = vld [vmem:[#allocation7 + $0x18] sm:$0xf]
    %v601 = vld [vmem:[#allocation7 + $0x1c] sm:$0xf]
    %v602 = vld [vmem:[#allocation7 + $0x20] sm:$0xf]
    %v603 = vld [vmem:[#allocation7 + $0x24] sm:$0xf]
    %v604 = vld [vmem:[#allocation7 + $0x28] sm:$0xf]
    %v605 = vld [vmem:[#allocation7 + $0x2c] sm:$0xf]
    %v606 = vld [vmem:[#allocation7 + $0x30] sm:$0xf]
    %v607 = vld [vmem:[#allocation7 + $0x34] sm:$0xf]
    %v608 = vld [vmem:[#allocation7 + $0x38] sm:$0xf]
    %v609 = vld [vmem:[#allocation7 + $0x3c] sm:$0xf]
    %v610 = vpack.c.bf16 %v471, %v468
    %v611 = vpack.c.bf16 %v479, %v476
    %v612 = vpack.c.bf16 %v487, %v484
    %v613 = vpack.c.bf16 %v495, %v492
    %v614 = vpack.c.bf16 %v503, %v500
    %v615 = vpack.c.bf16 %v511, %v508
    %v616 = vpack.c.bf16 %v519, %v516
    %v617 = vpack.c.bf16 %v527, %v524
    %v618 = vpack.c.bf16 %v535, %v532
    %v619 = vpack.c.bf16 %v543, %v540
    %v620 = vpack.c.bf16 %v551, %v548
    %v621 = vpack.c.bf16 %v559, %v556
    %v622 = vpack.c.bf16 %v567, %v564
    %v623 = vpack.c.bf16 %v575, %v572
    %v624 = vpack.c.bf16 %v583, %v580
    %v625 = vpack.c.bf16 %v591, %v588
    %v626 = vld [vmem:[#allocation8] sm:$0xf]
    %v627 = vld [vmem:[#allocation8 + $0x4] sm:$0xf]
    %v628 = vld [vmem:[#allocation8 + $0x8] sm:$0xf]
    %v629 = vld [vmem:[#allocation8 + $0xc] sm:$0xf]
    %v630 = vld [vmem:[#allocation8 + $0x10] sm:$0xf]
    %v631 = vld [vmem:[#allocation8 + $0x14] sm:$0xf]
    %v632 = vld [vmem:[#allocation8 + $0x18] sm:$0xf]
    %v633 = vld [vmem:[#allocation8 + $0x1c] sm:$0xf]
    %v634 = vld [vmem:[#allocation8 + $0x20] sm:$0xf]
    %v635 = vld [vmem:[#allocation8 + $0x24] sm:$0xf]
    %v636 = vld [vmem:[#allocation8 + $0x28] sm:$0xf]
    %v637 = vld [vmem:[#allocation8 + $0x2c] sm:$0xf]
    %v638 = vld [vmem:[#allocation8 + $0x30] sm:$0xf]
    %v639 = vld [vmem:[#allocation8 + $0x34] sm:$0xf]
    %v640 = vld [vmem:[#allocation8 + $0x38] sm:$0xf]
    %v641 = vld [vmem:[#allocation8 + $0x3c] sm:$0xf]
    %v658 = vunpack.c.l.b16 %v626
    %v659 = vunpack.c.l.b16 %v627
    %v660 = vunpack.c.l.b16 %v628
    %v661 = vunpack.c.l.b16 %v629
    %v662 = vunpack.c.l.b16 %v630
    %v663 = vunpack.c.l.b16 %v631
    %v664 = vunpack.c.l.b16 %v632
    %v665 = vunpack.c.l.b16 %v633
    %v666 = vunpack.c.l.b16 %v634
    %v667 = vunpack.c.l.b16 %v635
    %v668 = vunpack.c.l.b16 %v636
    %v669 = vunpack.c.l.b16 %v637
    %v670 = vunpack.c.l.b16 %v638
    %v671 = vunpack.c.l.b16 %v639
    %v672 = vunpack.c.l.b16 %v640
    %v673 = vunpack.c.l.b16 %v641
    %v674 = vpack.c.b16 %v659, %v658
    %v675 = vpack.c.b16 %v661, %v660
    %v676 = vpack.c.b16 %v663, %v662
    %v677 = vpack.c.b16 %v665, %v664
    %v678 = vpack.c.b16 %v667, %v666
    %v679 = vpack.c.b16 %v669, %v668
    %v680 = vpack.c.b16 %v671, %v670
    %v681 = vpack.c.b16 %v673, %v672
    %690 = vmatprep.subr.bf16.mxu0 0
    %691 = vmatpush1.bf16.msra.mxu0 %v674
    %692 = vmatprep.subr.bf16.mxu0 0
    %693 = vmatpush1.bf16.msra.mxu0 %v675
    %694 = vmatprep.subr.bf16.mxu0 0
    %695 = vmatpush1.bf16.msra.mxu0 %v676
    %696 = vmatprep.subr.bf16.mxu0 0
    %697 = vmatpush1.bf16.msra.mxu0 %v677
    %698 = vmatprep.subr.bf16.mxu0 0
    %699 = vmatpush1.bf16.msra.mxu0 %v678
    %700 = vmatprep.subr.bf16.mxu0 0
    %701 = vmatpush1.bf16.msra.mxu0 %v679
    %702 = vmatprep.subr.bf16.mxu0 0
    %703 = vmatpush1.bf16.msra.mxu0 %v680
    %704 = vmatprep.subr.bf16.mxu0 0
    %705 = vmatpush1.bf16.msra.mxu0 %v681
    %706 = vmatprep.subr.bf16.mxu0 0
    %707 = vmatpush1.bf16.msra.mxu0 0
    %708 = vmatprep.subr.bf16.mxu0 0
    %709 = vmatpush1.bf16.msra.mxu0 0
    %710 = vmatprep.subr.bf16.mxu0 0
    %711 = vmatpush1.bf16.msra.mxu0 0
    %712 = vmatprep.subr.bf16.mxu0 0
    %713 = vmatpush1.bf16.msra.mxu0 0
    %714 = vmatprep.subr.bf16.mxu0 0
    %715 = vmatpush1.bf16.msra.mxu0 0
    %716 = vmatprep.subr.bf16.mxu0 0
    %717 = vmatpush1.bf16.msra.mxu0 0
    %718 = vmatprep.subr.bf16.mxu0 0
    %719 = vmatpush1.bf16.msra.mxu0 0
    %720 = vmatprep.subr.bf16.mxu0 0
    %721 = vmatpush1.bf16.msra.mxu0 0
    %722 = vmatprep.mubr.bf16.mxu0 0
    %723 = vmatmul.mubr.bf16.gmra.mrb[0].mxu0 %v610
    %v724 = vpop.f32.mrb[0].mxu0
    %v725 = vadd.f32 0.0, %v724
    %v726 = vpop.f32.mrb[0].mxu0
    %v727 = vpop.f32.mrb[0].mxu0
    %v728 = vadd.f32 0.0, %v727
    %v729 = vpop.f32.mrb[0].mxu0
    %730 = vmatprep.mubr.bf16.mxu0 0
    %731 = vmatmul.mubr.bf16.gmra.mrb[0].mxu0 %v611
    %v732 = vpop.f32.mrb[0].mxu0
    %v733 = vadd.f32 0.0, %v732
    %v734 = vpop.f32.mrb[0].mxu0
    %v735 = vpop.f32.mrb[0].mxu0
    %v736 = vadd.f32 0.0, %v735
    %v737 = vpop.f32.mrb[0].mxu0
    %738 = vmatprep.mubr.bf16.mxu0 0
    %739 = vmatmul.mubr.bf16.gmra.mrb[0].mxu0 %v612
    %v740 = vpop.f32.mrb[0].mxu0
    %v741 = vadd.f32 0.0, %v740
    %v742 = vpop.f32.mrb[0].mxu0
    %v743 = vpop.f32.mrb[0].mxu0
    %v744 = vadd.f32 0.0, %v743
    %v745 = vpop.f32.mrb[0].mxu0
    %746 = vmatprep.mubr.bf16.mxu0 0
    %747 = vmatmul.mubr.bf16.gmra.mrb[0].mxu0 %v613
    %v748 = vpop.f32.mrb[0].mxu0
    %v749 = vadd.f32 0.0, %v748
    %v750 = vpop.f32.mrb[0].mxu0
    %v751 = vpop.f32.mrb[0].mxu0
    %v752 = vadd.f32 0.0, %v751
    %v753 = vpop.f32.mrb[0].mxu0
    %754 = vmatprep.mubr.bf16.mxu0 0
    %755 = vmatmul.mubr.bf16.gmra.mrb[0].mxu0 %v614
    %v756 = vpop.f32.mrb[0].mxu0
    %v757 = vadd.f32 0.0, %v756
    %v758 = vpop.f32.mrb[0].mxu0
    %v759 = vpop.f32.mrb[0].mxu0
    %v760 = vadd.f32 0.0, %v759
    %v761 = vpop.f32.mrb[0].mxu0
    %762 = vmatprep.mubr.bf16.mxu0 0
    %763 = vmatmul.mubr.bf16.gmra.mrb[0].mxu0 %v615
    %v764 = vpop.f32.mrb[0].mxu0
    %v765 = vadd.f32 0.0, %v764
    %v766 = vpop.f32.mrb[0].mxu0
    %v767 = vpop.f32.mrb[0].mxu0
    %v768 = vadd.f32 0.0, %v767
    %v769 = vpop.f32.mrb[0].mxu0
    %770 = vmatprep.mubr.bf16.mxu0 0
    %771 = vmatmul.mubr.bf16.gmra.mrb[0].mxu0 %v616
    %v772 = vpop.f32.mrb[0].mxu0
    %v773 = vadd.f32 0.0, %v772
    %v774 = vpop.f32.mrb[0].mxu0
    %v775 = vpop.f32.mrb[0].mxu0
    %v776 = vadd.f32 0.0, %v775
    %v777 = vpop.f32.mrb[0].mxu0
    %778 = vmatprep.mubr.bf16.mxu0 0
    %779 = vmatmul.mubr.bf16.gmra.mrb[0].mxu0 %v617
    %v780 = vpop.f32.mrb[0].mxu0
    %v781 = vadd.f32 0.0, %v780
    %v782 = vpop.f32.mrb[0].mxu0
    %v783 = vpop.f32.mrb[0].mxu0
    %v784 = vadd.f32 0.0, %v783
    %v785 = vpop.f32.mrb[0].mxu0
    %786 = vmatprep.mubr.bf16.mxu0 0
    %787 = vmatmul.mubr.bf16.gmra.mrb[0].mxu0 %v618
    %v788 = vpop.f32.mrb[0].mxu0
    %v789 = vadd.f32 0.0, %v788
    %v790 = vpop.f32.mrb[0].mxu0
    %v791 = vpop.f32.mrb[0].mxu0
    %v792 = vadd.f32 0.0, %v791
    %v793 = vpop.f32.mrb[0].mxu0
    %794 = vmatprep.mubr.bf16.mxu0 0
    %795 = vmatmul.mubr.bf16.gmra.mrb[0].mxu0 %v619
    %v796 = vpop.f32.mrb[0].mxu0
    %v797 = vadd.f32 0.0, %v796
    %v798 = vpop.f32.mrb[0].mxu0
    %v799 = vpop.f32.mrb[0].mxu0
    %v800 = vadd.f32 0.0, %v799
    %v801 = vpop.f32.mrb[0].mxu0
    %802 = vmatprep.mubr.bf16.mxu0 0
    %803 = vmatmul.mubr.bf16.gmra.mrb[0].mxu0 %v620
    %v804 = vpop.f32.mrb[0].mxu0
    %v805 = vadd.f32 0.0, %v804
    %v806 = vpop.f32.mrb[0].mxu0
    %v807 = vpop.f32.mrb[0].mxu0
    %v808 = vadd.f32 0.0, %v807
    %v809 = vpop.f32.mrb[0].mxu0
    %810 = vmatprep.mubr.bf16.mxu0 0
    %811 = vmatmul.mubr.bf16.gmra.mrb[0].mxu0 %v621
    %v812 = vpop.f32.mrb[0].mxu0
    %v813 = vadd.f32 0.0, %v812
    %v814 = vpop.f32.mrb[0].mxu0
    %v815 = vpop.f32.mrb[0].mxu0
    %v816 = vadd.f32 0.0, %v815
    %v817 = vpop.f32.mrb[0].mxu0
    %818 = vmatprep.mubr.bf16.mxu0 0
    %819 = vmatmul.mubr.bf16.gmra.mrb[0].mxu0 %v622
    %v820 = vpop.f32.mrb[0].mxu0
    %v821 = vadd.f32 0.0, %v820
    %v822 = vpop.f32.mrb[0].mxu0
    %v823 = vpop.f32.mrb[0].mxu0
    %v824 = vadd.f32 0.0, %v823
    %v825 = vpop.f32.mrb[0].mxu0
    %826 = vmatprep.mubr.bf16.mxu0 0
    %827 = vmatmul.mubr.bf16.gmra.mrb[0].mxu0 %v623
    %v828 = vpop.f32.mrb[0].mxu0
    %v829 = vadd.f32 0.0, %v828
    %v830 = vpop.f32.mrb[0].mxu0
    %v831 = vpop.f32.mrb[0].mxu0
    %v832 = vadd.f32 0.0, %v831
    %v833 = vpop.f32.mrb[0].mxu0
    %834 = vmatprep.mubr.bf16.mxu0 0
    %835 = vmatmul.mubr.bf16.gmra.mrb[0].mxu0 %v624
    %v836 = vpop.f32.mrb[0].mxu0
    %v837 = vadd.f32 0.0, %v836
    %v838 = vpop.f32.mrb[0].mxu0
    %v839 = vpop.f32.mrb[0].mxu0
    %v840 = vadd.f32 0.0, %v839
    %v841 = vpop.f32.mrb[0].mxu0
    %842 = vmatprep.mubr.bf16.mxu0 0
    %843 = vmatmul.mubr.bf16.gmra.mrb[0].mxu0 %v625
    %v844 = vpop.f32.mrb[0].mxu0
    %v845 = vadd.f32 0.0, %v844
    %v846 = vpop.f32.mrb[0].mxu0
    %v847 = vpop.f32.mrb[0].mxu0
    %v848 = vadd.f32 0.0, %v847
    %v849 = vpop.f32.mrb[0].mxu0
    %850 = vdwg.mxu0
    %v867 = vunpack.c.l.b16 %v594
    %v868 = vunpack.c.l.b16 %v595
    %v869 = vunpack.c.l.b16 %v596
    %v870 = vunpack.c.l.b16 %v597
    %v871 = vunpack.c.l.b16 %v598
    %v872 = vunpack.c.l.b16 %v599
    %v873 = vunpack.c.l.b16 %v600
    %v874 = vunpack.c.l.b16 %v601
    %v875 = vunpack.c.l.b16 %v602
    %v876 = vunpack.c.l.b16 %v603
    %v877 = vunpack.c.l.b16 %v604
    %v878 = vunpack.c.l.b16 %v605
    %v879 = vunpack.c.l.b16 %v606
    %v880 = vunpack.c.l.b16 %v607
    %v881 = vunpack.c.l.b16 %v608
    %v882 = vunpack.c.l.b16 %v609
    %v883 = vpack.c.b16 %v868, %v867
    %v884 = vpack.c.b16 %v870, %v869
    %v885 = vpack.c.b16 %v872, %v871
    %v886 = vpack.c.b16 %v874, %v873
    %v887 = vpack.c.b16 %v876, %v875
    %v888 = vpack.c.b16 %v878, %v877
    %v889 = vpack.c.b16 %v880, %v879
    %v890 = vpack.c.b16 %v882, %v881
    %899 = vmatprep.subr.bf16.mxu0 0
    %900 = vmatpush1.bf16.msra.mxu0 %v883
    %901 = vmatprep.subr.bf16.mxu0 0
    %902 = vmatpush1.bf16.msra.mxu0 %v884
    %903 = vmatprep.subr.bf16.mxu0 0
    %904 = vmatpush1.bf16.msra.mxu0 %v885
    %905 = vmatprep.subr.bf16.mxu0 0
    %906 = vmatpush1.bf16.msra.mxu0 %v886
    %907 = vmatprep.subr.bf16.mxu0 0
    %908 = vmatpush1.bf16.msra.mxu0 %v887
    %909 = vmatprep.subr.bf16.mxu0 0
    %910 = vmatpush1.bf16.msra.mxu0 %v888
    %911 = vmatprep.subr.bf16.mxu0 0
    %912 = vmatpush1.bf16.msra.mxu0 %v889
    %913 = vmatprep.subr.bf16.mxu0 0
    %914 = vmatpush1.bf16.msra.mxu0 %v890
    %915 = vmatprep.subr.bf16.mxu0 0
    %916 = vmatpush1.bf16.msra.mxu0 0
    %917 = vmatprep.subr.bf16.mxu0 0
    %918 = vmatpush1.bf16.msra.mxu0 0
    %919 = vmatprep.subr.bf16.mxu0 0
    %920 = vmatpush1.bf16.msra.mxu0 0
    %921 = vmatprep.subr.bf16.mxu0 0
    %922 = vmatpush1.bf16.msra.mxu0 0
    %923 = vmatprep.subr.bf16.mxu0 0
    %924 = vmatpush1.bf16.msra.mxu0 0
    %925 = vmatprep.subr.bf16.mxu0 0
    %926 = vmatpush1.bf16.msra.mxu0 0
    %927 = vmatprep.subr.bf16.mxu0 0
    %928 = vmatpush1.bf16.msra.mxu0 0
    %929 = vmatprep.subr.bf16.mxu0 0
    %930 = vmatpush1.bf16.msra.mxu0 0
    %931 = vmatprep.mubr.bf16.mxu0 0
    %932 = vmatmul.mubr.bf16.gmra.mrb[0].mxu0 %v401
    %v933 = vpop.f32.mrb[0].mxu0
    %v934 = vadd.f32 %v725, %v933
    %v935 = vpop.f32.mrb[0].mxu0
    %v936 = vpop.f32.mrb[0].mxu0
    %v937 = vadd.f32 %v728, %v936
    %v938 = vpop.f32.mrb[0].mxu0
    %939 = vmatprep.mubr.bf16.mxu0 0
    %940 = vmatmul.mubr.bf16.gmra.mrb[0].mxu0 %v402
    %v941 = vpop.f32.mrb[0].mxu0
    %v942 = vadd.f32 %v733, %v941
    %v943 = vpop.f32.mrb[0].mxu0
    %v944 = vpop.f32.mrb[0].mxu0
    %v945 = vadd.f32 %v736, %v944
    %v946 = vpop.f32.mrb[0].mxu0
    %947 = vmatprep.mubr.bf16.mxu0 0
    %948 = vmatmul.mubr.bf16.gmra.mrb[0].mxu0 %v403
    %v949 = vpop.f32.mrb[0].mxu0
    %v950 = vadd.f32 %v741, %v949
    %v951 = vpop.f32.mrb[0].mxu0
    %v952 = vpop.f32.mrb[0].mxu0
    %v953 = vadd.f32 %v744, %v952
    %v954 = vpop.f32.mrb[0].mxu0
    %955 = vmatprep.mubr.bf16.mxu0 0
    %956 = vmatmul.mubr.bf16.gmra.mrb[0].mxu0 %v404
    %v957 = vpop.f32.mrb[0].mxu0
    %v958 = vadd.f32 %v749, %v957
    %v959 = vpop.f32.mrb[0].mxu0
    %v960 = vpop.f32.mrb[0].mxu0
    %v961 = vadd.f32 %v752, %v960
    %v962 = vpop.f32.mrb[0].mxu0
    %963 = vmatprep.mubr.bf16.mxu0 0
    %964 = vmatmul.mubr.bf16.gmra.mrb[0].mxu0 %v405
    %v965 = vpop.f32.mrb[0].mxu0
    %v966 = vadd.f32 %v757, %v965
    %v967 = vpop.f32.mrb[0].mxu0
    %v968 = vpop.f32.mrb[0].mxu0
    %v969 = vadd.f32 %v760, %v968
    %v970 = vpop.f32.mrb[0].mxu0
    %971 = vmatprep.mubr.bf16.mxu0 0
    %972 = vmatmul.mubr.bf16.gmra.mrb[0].mxu0 %v406
    %v973 = vpop.f32.mrb[0].mxu0
    %v974 = vadd.f32 %v765, %v973
    %v975 = vpop.f32.mrb[0].mxu0
    %v976 = vpop.f32.mrb[0].mxu0
    %v977 = vadd.f32 %v768, %v976
    %v978 = vpop.f32.mrb[0].mxu0
    %979 = vmatprep.mubr.bf16.mxu0 0
    %980 = vmatmul.mubr.bf16.gmra.mrb[0].mxu0 %v407
    %v981 = vpop.f32.mrb[0].mxu0
    %v982 = vadd.f32 %v773, %v981
    %v983 = vpop.f32.mrb[0].mxu0
    %v984 = vpop.f32.mrb[0].mxu0
    %v985 = vadd.f32 %v776, %v984
    %v986 = vpop.f32.mrb[0].mxu0
    %987 = vmatprep.mubr.bf16.mxu0 0
    %988 = vmatmul.mubr.bf16.gmra.mrb[0].mxu0 %v408
    %v989 = vpop.f32.mrb[0].mxu0
    %v990 = vadd.f32 %v781, %v989
    %v991 = vpop.f32.mrb[0].mxu0
    %v992 = vpop.f32.mrb[0].mxu0
    %v993 = vadd.f32 %v784, %v992
    %v994 = vpop.f32.mrb[0].mxu0
    %995 = vmatprep.mubr.bf16.mxu0 0
    %996 = vmatmul.mubr.bf16.gmra.mrb[0].mxu0 %v409
    %v997 = vpop.f32.mrb[0].mxu0
    %v998 = vadd.f32 %v789, %v997
    %v999 = vpop.f32.mrb[0].mxu0
    %v1000 = vpop.f32.mrb[0].mxu0
    %v1001 = vadd.f32 %v792, %v1000
    %v1002 = vpop.f32.mrb[0].mxu0
    %1003 = vmatprep.mubr.bf16.mxu0 0
    %1004 = vmatmul.mubr.bf16.gmra.mrb[0].mxu0 %v410
    %v1005 = vpop.f32.mrb[0].mxu0
    %v1006 = vadd.f32 %v797, %v1005
    %v1007 = vpop.f32.mrb[0].mxu0
    %v1008 = vpop.f32.mrb[0].mxu0
    %v1009 = vadd.f32 %v800, %v1008
    %v1010 = vpop.f32.mrb[0].mxu0
    %1011 = vmatprep.mubr.bf16.mxu0 0
    %1012 = vmatmul.mubr.bf16.gmra.mrb[0].mxu0 %v411
    %v1013 = vpop.f32.mrb[0].mxu0
    %v1014 = vadd.f32 %v805, %v1013
    %v1015 = vpop.f32.mrb[0].mxu0
    %v1016 = vpop.f32.mrb[0].mxu0
    %v1017 = vadd.f32 %v808, %v1016
    %v1018 = vpop.f32.mrb[0].mxu0
    %1019 = vmatprep.mubr.bf16.mxu0 0
    %1020 = vmatmul.mubr.bf16.gmra.mrb[0].mxu0 %v412
    %v1021 = vpop.f32.mrb[0].mxu0
    %v1022 = vadd.f32 %v813, %v1021
    %v1023 = vpop.f32.mrb[0].mxu0
    %v1024 = vpop.f32.mrb[0].mxu0
    %v1025 = vadd.f32 %v816, %v1024
    %v1026 = vpop.f32.mrb[0].mxu0
    %1027 = vmatprep.mubr.bf16.mxu0 0
    %1028 = vmatmul.mubr.bf16.gmra.mrb[0].mxu0 %v413
    %v1029 = vpop.f32.mrb[0].mxu0
    %v1030 = vadd.f32 %v821, %v1029
    %v1031 = vpop.f32.mrb[0].mxu0
    %v1032 = vpop.f32.mrb[0].mxu0
    %v1033 = vadd.f32 %v824, %v1032
    %v1034 = vpop.f32.mrb[0].mxu0
    %1035 = vmatprep.mubr.bf16.mxu0 0
    %1036 = vmatmul.mubr.bf16.gmra.mrb[0].mxu0 %v414
    %v1037 = vpop.f32.mrb[0].mxu0
    %v1038 = vadd.f32 %v829, %v1037
    %v1039 = vpop.f32.mrb[0].mxu0
    %v1040 = vpop.f32.mrb[0].mxu0
    %v1041 = vadd.f32 %v832, %v1040
    %v1042 = vpop.f32.mrb[0].mxu0
    %1043 = vmatprep.mubr.bf16.mxu0 0
    %1044 = vmatmul.mubr.bf16.gmra.mrb[0].mxu0 %v415
    %v1045 = vpop.f32.mrb[0].mxu0
    %v1046 = vadd.f32 %v837, %v1045
    %v1047 = vpop.f32.mrb[0].mxu0
    %v1048 = vpop.f32.mrb[0].mxu0
    %v1049 = vadd.f32 %v840, %v1048
    %v1050 = vpop.f32.mrb[0].mxu0
    %1051 = vmatprep.mubr.bf16.mxu0 0
    %1052 = vmatmul.mubr.bf16.gmra.mrb[0].mxu0 %v416
    %v1053 = vpop.f32.mrb[0].mxu0
    %v1054 = vadd.f32 %v845, %v1053
    %v1055 = vpop.f32.mrb[0].mxu0
    %v1056 = vpop.f32.mrb[0].mxu0
    %v1057 = vadd.f32 %v848, %v1056
    %v1058 = vpop.f32.mrb[0].mxu0
    %1059 = vdwg.mxu0
    %v1060 = vld [vmem:[%s4] sm:$0x1]
    %v1062 = vlaneseq
    %v1063 = vshrl.u32 %v1062, 7
    %v1064 = vsub.s32 0, %v1063
    %v1065 = vrot.slane %v1060, %v1064
    %v1067 = vadd.f32 %v934, %v1065
    %v1068 = vadd.f32 %v937, %v1065
    %v1069 = vadd.f32 %v942, %v1065
    %v1070 = vadd.f32 %v945, %v1065
    %v1071 = vadd.f32 %v950, %v1065
    %v1072 = vadd.f32 %v953, %v1065
    %v1073 = vadd.f32 %v958, %v1065
    %v1074 = vadd.f32 %v961, %v1065
    %v1075 = vadd.f32 %v966, %v1065
    %v1076 = vadd.f32 %v969, %v1065
    %v1077 = vadd.f32 %v974, %v1065
    %v1078 = vadd.f32 %v977, %v1065
    %v1079 = vadd.f32 %v982, %v1065
    %v1080 = vadd.f32 %v985, %v1065
    %v1081 = vadd.f32 %v990, %v1065
    %v1082 = vadd.f32 %v993, %v1065
    %v1083 = vadd.f32 %v998, %v1065
    %v1084 = vadd.f32 %v1001, %v1065
    %v1085 = vadd.f32 %v1006, %v1065
    %v1086 = vadd.f32 %v1009, %v1065
    %v1087 = vadd.f32 %v1014, %v1065
    %v1088 = vadd.f32 %v1017, %v1065
    %v1089 = vadd.f32 %v1022, %v1065
    %v1090 = vadd.f32 %v1025, %v1065
    %v1091 = vadd.f32 %v1030, %v1065
    %v1092 = vadd.f32 %v1033, %v1065
    %v1093 = vadd.f32 %v1038, %v1065
    %v1094 = vadd.f32 %v1041, %v1065
    %v1095 = vadd.f32 %v1046, %v1065
    %v1096 = vadd.f32 %v1049, %v1065
    %v1097 = vadd.f32 %v1054, %v1065
    %v1098 = vadd.f32 %v1057, %v1065
    %v1099 = vmax.f32 %v1067, 0.0
    %v1100 = vmax.f32 %v1068, 0.0
    %v1101 = vmax.f32 %v1069, 0.0
    %v1102 = vmax.f32 %v1070, 0.0
    %v1103 = vmax.f32 %v1071, 0.0
    %v1104 = vmax.f32 %v1072, 0.0
    %v1105 = vmax.f32 %v1073, 0.0
    %v1106 = vmax.f32 %v1074, 0.0
    %v1107 = vmax.f32 %v1075, 0.0
    %v1108 = vmax.f32 %v1076, 0.0
    %v1109 = vmax.f32 %v1077, 0.0
    %v1110 = vmax.f32 %v1078, 0.0
    %v1111 = vmax.f32 %v1079, 0.0
    %v1112 = vmax.f32 %v1080, 0.0
    %v1113 = vmax.f32 %v1081, 0.0
    %v1114 = vmax.f32 %v1082, 0.0
    %v1115 = vmax.f32 %v1083, 0.0
    %v1116 = vmax.f32 %v1084, 0.0
    %v1117 = vmax.f32 %v1085, 0.0
    %v1118 = vmax.f32 %v1086, 0.0
    %v1119 = vmax.f32 %v1087, 0.0
    %v1120 = vmax.f32 %v1088, 0.0
    %v1121 = vmax.f32 %v1089, 0.0
    %v1122 = vmax.f32 %v1090, 0.0
    %v1123 = vmax.f32 %v1091, 0.0
    %v1124 = vmax.f32 %v1092, 0.0
    %v1125 = vmax.f32 %v1093, 0.0
    %v1126 = vmax.f32 %v1094, 0.0
    %v1127 = vmax.f32 %v1095, 0.0
    %v1128 = vmax.f32 %v1096, 0.0
    %v1129 = vmax.f32 %v1097, 0.0
    %v1130 = vmax.f32 %v1098, 0.0
    %v1131 = vpack.c.bf16 %v1100, %v1099
    %v1132 = vpack.c.bf16 %v1102, %v1101
    %v1133 = vpack.c.bf16 %v1104, %v1103
    %v1134 = vpack.c.bf16 %v1106, %v1105
    %v1135 = vpack.c.bf16 %v1108, %v1107
    %v1136 = vpack.c.bf16 %v1110, %v1109
    %v1137 = vpack.c.bf16 %v1112, %v1111
    %v1138 = vpack.c.bf16 %v1114, %v1113
    %v1139 = vpack.c.bf16 %v1116, %v1115
    %v1140 = vpack.c.bf16 %v1118, %v1117
    %v1141 = vpack.c.bf16 %v1120, %v1119
    %v1142 = vpack.c.bf16 %v1122, %v1121
    %v1143 = vpack.c.bf16 %v1124, %v1123
    %v1144 = vpack.c.bf16 %v1126, %v1125
    %v1145 = vpack.c.bf16 %v1128, %v1127
    %v1146 = vpack.c.bf16 %v1130, %v1129
    %1147 = vmatprep.subr.bf16.mxu0 0
    %1148 = vmatpush1.bf16.msra.mxu0 %v1131
    %1149 = vmatprep.subr.bf16.mxu0 0
    %1150 = vmatpush1.bf16.msra.mxu0 %v1132
    %1151 = vmatprep.subr.bf16.mxu0 0
    %1152 = vmatpush1.bf16.msra.mxu0 %v1133
    %1153 = vmatprep.subr.bf16.mxu0 0
    %1154 = vmatpush1.bf16.msra.mxu0 %v1134
    %1155 = vmatprep.subr.bf16.mxu0 0
    %1156 = vmatpush1.bf16.msra.mxu0 %v1135
    %1157 = vmatprep.subr.bf16.mxu0 0
    %1158 = vmatpush1.bf16.msra.mxu0 %v1136
    %1159 = vmatprep.subr.bf16.mxu0 0
    %1160 = vmatpush1.bf16.msra.mxu0 %v1137
    %1161 = vmatprep.subr.bf16.mxu0 0
    %1162 = vmatpush1.bf16.msra.mxu0 %v1138
    %1163 = vmatprep.subr.bf16.mxu0 0
    %1164 = vmatpush1.bf16.msra.mxu0 %v1139
    %1165 = vmatprep.subr.bf16.mxu0 0
    %1166 = vmatpush1.bf16.msra.mxu0 %v1140
    %1167 = vmatprep.subr.bf16.mxu0 0
    %1168 = vmatpush1.bf16.msra.mxu0 %v1141
    %1169 = vmatprep.subr.bf16.mxu0 0
    %1170 = vmatpush1.bf16.msra.mxu0 %v1142
    %1171 = vmatprep.subr.bf16.mxu0 0
    %1172 = vmatpush1.bf16.msra.mxu0 %v1143
    %1173 = vmatprep.subr.bf16.mxu0 0
    %1174 = vmatpush1.bf16.msra.mxu0 %v1144
    %1175 = vmatprep.subr.bf16.mxu0 0
    %1176 = vmatpush1.bf16.msra.mxu0 %v1145
    %1177 = vmatprep.subr.bf16.mxu0 0
    %1178 = vmatpush1.bf16.msra.mxu0 %v1146
    %1179 = vmatprep.mubr.bf16.mxu0 %v274
    %1180 = vmatmul.mubr.bf16.gmra.mrb[0].mxu0 %v273
    %v1181 = vpop.f32.mrb[0].mxu0
    %v1182 = vadd.f32 0.0, %v1181
    %v1183 = vpop.f32.mrb[0].mxu0
    %v1184 = vpop.f32.mrb[0].mxu0
    %v1185 = vadd.f32 0.0, %v1184
    %v1186 = vpop.f32.mrb[0].mxu0
    %1187 = vmatprep.mubr.bf16.mxu0 %v276
    %1188 = vmatmul.mubr.bf16.gmra.mrb[0].mxu0 %v275
    %v1189 = vpop.f32.mrb[0].mxu0
    %v1190 = vadd.f32 0.0, %v1189
    %v1191 = vpop.f32.mrb[0].mxu0
    %v1192 = vpop.f32.mrb[0].mxu0
    %v1193 = vadd.f32 0.0, %v1192
    %v1194 = vpop.f32.mrb[0].mxu0
    %1195 = vmatprep.mubr.bf16.mxu0 %v278
    %1196 = vmatmul.mubr.bf16.gmra.mrb[0].mxu0 %v277
    %v1197 = vpop.f32.mrb[0].mxu0
    %v1198 = vadd.f32 0.0, %v1197
    %v1199 = vpop.f32.mrb[0].mxu0
    %v1200 = vpop.f32.mrb[0].mxu0
    %v1201 = vadd.f32 0.0, %v1200
    %v1202 = vpop.f32.mrb[0].mxu0
    %1203 = vmatprep.mubr.bf16.mxu0 %v280
    %1204 = vmatmul.mubr.bf16.gmra.mrb[0].mxu0 %v279
    %v1205 = vpop.f32.mrb[0].mxu0
    %v1206 = vadd.f32 0.0, %v1205
    %v1207 = vpop.f32.mrb[0].mxu0
    %v1208 = vpop.f32.mrb[0].mxu0
    %v1209 = vadd.f32 0.0, %v1208
    %v1210 = vpop.f32.mrb[0].mxu0
    %1211 = vmatprep.mubr.bf16.mxu0 %v282
    %1212 = vmatmul.mubr.bf16.gmra.mrb[0].mxu0 %v281
    %v1213 = vpop.f32.mrb[0].mxu0
    %v1214 = vadd.f32 0.0, %v1213
    %v1215 = vpop.f32.mrb[0].mxu0
    %v1216 = vpop.f32.mrb[0].mxu0
    %v1217 = vadd.f32 0.0, %v1216
    %v1218 = vpop.f32.mrb[0].mxu0
    %1219 = vmatprep.mubr.bf16.mxu0 %v284
    %1220 = vmatmul.mubr.bf16.gmra.mrb[0].mxu0 %v283
    %v1221 = vpop.f32.mrb[0].mxu0
    %v1222 = vadd.f32 0.0, %v1221
    %v1223 = vpop.f32.mrb[0].mxu0
    %v1224 = vpop.f32.mrb[0].mxu0
    %v1225 = vadd.f32 0.0, %v1224
    %v1226 = vpop.f32.mrb[0].mxu0
    %1227 = vmatprep.mubr.bf16.mxu0 %v286
    %1228 = vmatmul.mubr.bf16.gmra.mrb[0].mxu0 %v285
    %v1229 = vpop.f32.mrb[0].mxu0
    %v1230 = vadd.f32 0.0, %v1229
    %v1231 = vpop.f32.mrb[0].mxu0
    %v1232 = vpop.f32.mrb[0].mxu0
    %v1233 = vadd.f32 0.0, %v1232
    %v1234 = vpop.f32.mrb[0].mxu0
    %1235 = vmatprep.mubr.bf16.mxu0 %v288
    %1236 = vmatmul.mubr.bf16.gmra.mrb[0].mxu0 %v287
    %v1237 = vpop.f32.mrb[0].mxu0
    %v1238 = vadd.f32 0.0, %v1237
    %v1239 = vpop.f32.mrb[0].mxu0
    %v1240 = vpop.f32.mrb[0].mxu0
    %v1241 = vadd.f32 0.0, %v1240
    %v1242 = vpop.f32.mrb[0].mxu0
    %1243 = vmatprep.mubr.bf16.mxu0 %v290
    %1244 = vmatmul.mubr.bf16.gmra.mrb[0].mxu0 %v289
    %v1245 = vpop.f32.mrb[0].mxu0
    %v1246 = vadd.f32 0.0, %v1245
    %v1247 = vpop.f32.mrb[0].mxu0
    %v1248 = vpop.f32.mrb[0].mxu0
    %v1249 = vadd.f32 0.0, %v1248
    %v1250 = vpop.f32.mrb[0].mxu0
    %1251 = vmatprep.mubr.bf16.mxu0 %v292
    %1252 = vmatmul.mubr.bf16.gmra.mrb[0].mxu0 %v291
    %v1253 = vpop.f32.mrb[0].mxu0
    %v1254 = vadd.f32 0.0, %v1253
    %v1255 = vpop.f32.mrb[0].mxu0
    %v1256 = vpop.f32.mrb[0].mxu0
    %v1257 = vadd.f32 0.0, %v1256
    %v1258 = vpop.f32.mrb[0].mxu0
    %1259 = vmatprep.mubr.bf16.mxu0 %v294
    %1260 = vmatmul.mubr.bf16.gmra.mrb[0].mxu0 %v293
    %v1261 = vpop.f32.mrb[0].mxu0
    %v1262 = vadd.f32 0.0, %v1261
    %v1263 = vpop.f32.mrb[0].mxu0
    %v1264 = vpop.f32.mrb[0].mxu0
    %v1265 = vadd.f32 0.0, %v1264
    %v1266 = vpop.f32.mrb[0].mxu0
    %1267 = vmatprep.mubr.bf16.mxu0 %v296
    %1268 = vmatmul.mubr.bf16.gmra.mrb[0].mxu0 %v295
    %v1269 = vpop.f32.mrb[0].mxu0
    %v1270 = vadd.f32 0.0, %v1269
    %v1271 = vpop.f32.mrb[0].mxu0
    %v1272 = vpop.f32.mrb[0].mxu0
    %v1273 = vadd.f32 0.0, %v1272
    %v1274 = vpop.f32.mrb[0].mxu0
    %1275 = vmatprep.mubr.bf16.mxu0 %v298
    %1276 = vmatmul.mubr.bf16.gmra.mrb[0].mxu0 %v297
    %v1277 = vpop.f32.mrb[0].mxu0
    %v1278 = vadd.f32 0.0, %v1277
    %v1279 = vpop.f32.mrb[0].mxu0
    %v1280 = vpop.f32.mrb[0].mxu0
    %v1281 = vadd.f32 0.0, %v1280
    %v1282 = vpop.f32.mrb[0].mxu0
    %1283 = vmatprep.mubr.bf16.mxu0 %v300
    %1284 = vmatmul.mubr.bf16.gmra.mrb[0].mxu0 %v299
    %v1285 = vpop.f32.mrb[0].mxu0
    %v1286 = vadd.f32 0.0, %v1285
    %v1287 = vpop.f32.mrb[0].mxu0
    %v1288 = vpop.f32.mrb[0].mxu0
    %v1289 = vadd.f32 0.0, %v1288
    %v1290 = vpop.f32.mrb[0].mxu0
    %1291 = vmatprep.mubr.bf16.mxu0 %v302
    %1292 = vmatmul.mubr.bf16.gmra.mrb[0].mxu0 %v301
    %v1293 = vpop.f32.mrb[0].mxu0
    %v1294 = vadd.f32 0.0, %v1293
    %v1295 = vpop.f32.mrb[0].mxu0
    %v1296 = vpop.f32.mrb[0].mxu0
    %v1297 = vadd.f32 0.0, %v1296
    %v1298 = vpop.f32.mrb[0].mxu0
    %1299 = vmatprep.mubr.bf16.mxu0 %v304
    %1300 = vmatmul.mubr.bf16.gmra.mrb[0].mxu0 %v303
    %v1301 = vpop.f32.mrb[0].mxu0
    %v1302 = vadd.f32 0.0, %v1301
    %v1303 = vpop.f32.mrb[0].mxu0
    %v1304 = vpop.f32.mrb[0].mxu0
    %v1305 = vadd.f32 0.0, %v1304
    %v1306 = vpop.f32.mrb[0].mxu0
    %1307 = vdwg.mxu0
    %v1308 = vld [vmem:[#allocation10] sm:$0xf]
    %v1309 = vld [vmem:[#allocation10 + $0x4] sm:$0xf]
    %v1310 = vld [vmem:[#allocation10 + $0x8] sm:$0xf]
    %v1311 = vld [vmem:[#allocation10 + $0xc] sm:$0xf]
    %v1312 = vld [vmem:[#allocation10 + $0x10] sm:$0xf]
    %v1313 = vld [vmem:[#allocation10 + $0x14] sm:$0xf]
    %v1314 = vld [vmem:[#allocation10 + $0x18] sm:$0xf]
    %v1315 = vld [vmem:[#allocation10 + $0x1c] sm:$0xf]
    %v1316 = vld [vmem:[#allocation10 + $0x20] sm:$0xf]
    %v1317 = vld [vmem:[#allocation10 + $0x24] sm:$0xf]
    %v1318 = vld [vmem:[#allocation10 + $0x28] sm:$0xf]
    %v1319 = vld [vmem:[#allocation10 + $0x2c] sm:$0xf]
    %v1320 = vld [vmem:[#allocation10 + $0x30] sm:$0xf]
    %v1321 = vld [vmem:[#allocation10 + $0x34] sm:$0xf]
    %v1322 = vld [vmem:[#allocation10 + $0x38] sm:$0xf]
    %v1323 = vld [vmem:[#allocation10 + $0x3c] sm:$0xf]
    %v1324 = vpack.c.bf16 %v1185, %v1182
    %v1325 = vpack.c.bf16 %v1193, %v1190
    %v1326 = vpack.c.bf16 %v1201, %v1198
    %v1327 = vpack.c.bf16 %v1209, %v1206
    %v1328 = vpack.c.bf16 %v1217, %v1214
    %v1329 = vpack.c.bf16 %v1225, %v1222
    %v1330 = vpack.c.bf16 %v1233, %v1230
    %v1331 = vpack.c.bf16 %v1241, %v1238
    %v1332 = vpack.c.bf16 %v1249, %v1246
    %v1333 = vpack.c.bf16 %v1257, %v1254
    %v1334 = vpack.c.bf16 %v1265, %v1262
    %v1335 = vpack.c.bf16 %v1273, %v1270
    %v1336 = vpack.c.bf16 %v1281, %v1278
    %v1337 = vpack.c.bf16 %v1289, %v1286
    %v1338 = vpack.c.bf16 %v1297, %v1294
    %v1339 = vpack.c.bf16 %v1305, %v1302
    %v1340 = vld [vmem:[#allocation11] sm:$0xf]
    %v1341 = vld [vmem:[#allocation11 + $0x4] sm:$0xf]
    %v1342 = vld [vmem:[#allocation11 + $0x8] sm:$0xf]
    %v1343 = vld [vmem:[#allocation11 + $0xc] sm:$0xf]
    %v1344 = vld [vmem:[#allocation11 + $0x10] sm:$0xf]
    %v1345 = vld [vmem:[#allocation11 + $0x14] sm:$0xf]
    %v1346 = vld [vmem:[#allocation11 + $0x18] sm:$0xf]
    %v1347 = vld [vmem:[#allocation11 + $0x1c] sm:$0xf]
    %v1348 = vld [vmem:[#allocation11 + $0x20] sm:$0xf]
    %v1349 = vld [vmem:[#allocation11 + $0x24] sm:$0xf]
    %v1350 = vld [vmem:[#allocation11 + $0x28] sm:$0xf]
    %v1351 = vld [vmem:[#allocation11 + $0x2c] sm:$0xf]
    %v1352 = vld [vmem:[#allocation11 + $0x30] sm:$0xf]
    %v1353 = vld [vmem:[#allocation11 + $0x34] sm:$0xf]
    %v1354 = vld [vmem:[#allocation11 + $0x38] sm:$0xf]
    %v1355 = vld [vmem:[#allocation11 + $0x3c] sm:$0xf]
    %v1372 = vunpack.c.l.b16 %v1340
    %v1373 = vunpack.c.l.b16 %v1341
    %v1374 = vunpack.c.l.b16 %v1342
    %v1375 = vunpack.c.l.b16 %v1343
    %v1376 = vunpack.c.l.b16 %v1344
    %v1377 = vunpack.c.l.b16 %v1345
    %v1378 = vunpack.c.l.b16 %v1346
    %v1379 = vunpack.c.l.b16 %v1347
    %v1380 = vunpack.c.l.b16 %v1348
    %v1381 = vunpack.c.l.b16 %v1349
    %v1382 = vunpack.c.l.b16 %v1350
    %v1383 = vunpack.c.l.b16 %v1351
    %v1384 = vunpack.c.l.b16 %v1352
    %v1385 = vunpack.c.l.b16 %v1353
    %v1386 = vunpack.c.l.b16 %v1354
    %v1387 = vunpack.c.l.b16 %v1355
    %v1388 = vpack.c.b16 %v1373, %v1372
    %v1389 = vpack.c.b16 %v1375, %v1374
    %v1390 = vpack.c.b16 %v1377, %v1376
    %v1391 = vpack.c.b16 %v1379, %v1378
    %v1392 = vpack.c.b16 %v1381, %v1380
    %v1393 = vpack.c.b16 %v1383, %v1382
    %v1394 = vpack.c.b16 %v1385, %v1384
    %v1395 = vpack.c.b16 %v1387, %v1386
    %1404 = vmatprep.subr.bf16.mxu0 0
    %1405 = vmatpush1.bf16.msra.mxu0 %v1388
    %1406 = vmatprep.subr.bf16.mxu0 0
    %1407 = vmatpush1.bf16.msra.mxu0 %v1389
    %1408 = vmatprep.subr.bf16.mxu0 0
    %1409 = vmatpush1.bf16.msra.mxu0 %v1390
    %1410 = vmatprep.subr.bf16.mxu0 0
    %1411 = vmatpush1.bf16.msra.mxu0 %v1391
    %1412 = vmatprep.subr.bf16.mxu0 0
    %1413 = vmatpush1.bf16.msra.mxu0 %v1392
    %1414 = vmatprep.subr.bf16.mxu0 0
    %1415 = vmatpush1.bf16.msra.mxu0 %v1393
    %1416 = vmatprep.subr.bf16.mxu0 0
    %1417 = vmatpush1.bf16.msra.mxu0 %v1394
    %1418 = vmatprep.subr.bf16.mxu0 0
    %1419 = vmatpush1.bf16.msra.mxu0 %v1395
    %1420 = vmatprep.subr.bf16.mxu0 0
    %1421 = vmatpush1.bf16.msra.mxu0 0
    %1422 = vmatprep.subr.bf16.mxu0 0
    %1423 = vmatpush1.bf16.msra.mxu0 0
    %1424 = vmatprep.subr.bf16.mxu0 0
    %1425 = vmatpush1.bf16.msra.mxu0 0
    %1426 = vmatprep.subr.bf16.mxu0 0
    %1427 = vmatpush1.bf16.msra.mxu0 0
    %1428 = vmatprep.subr.bf16.mxu0 0
    %1429 = vmatpush1.bf16.msra.mxu0 0
    %1430 = vmatprep.subr.bf16.mxu0 0
    %1431 = vmatpush1.bf16.msra.mxu0 0
    %1432 = vmatprep.subr.bf16.mxu0 0
    %1433 = vmatpush1.bf16.msra.mxu0 0
    %1434 = vmatprep.subr.bf16.mxu0 0
    %1435 = vmatpush1.bf16.msra.mxu0 0
    %1436 = vmatprep.mubr.bf16.mxu0 0
    %1437 = vmatmul.mubr.bf16.gmra.mrb[0].mxu0 %v1324
    %v1438 = vpop.f32.mrb[0].mxu0
    %v1439 = vadd.f32 0.0, %v1438
    %v1440 = vpop.f32.mrb[0].mxu0
    %v1441 = vpop.f32.mrb[0].mxu0
    %v1442 = vadd.f32 0.0, %v1441
    %v1443 = vpop.f32.mrb[0].mxu0
    %1444 = vmatprep.mubr.bf16.mxu0 0
    %1445 = vmatmul.mubr.bf16.gmra.mrb[0].mxu0 %v1325
    %v1446 = vpop.f32.mrb[0].mxu0
    %v1447 = vadd.f32 0.0, %v1446
    %v1448 = vpop.f32.mrb[0].mxu0
    %v1449 = vpop.f32.mrb[0].mxu0
    %v1450 = vadd.f32 0.0, %v1449
    %v1451 = vpop.f32.mrb[0].mxu0
    %1452 = vmatprep.mubr.bf16.mxu0 0
    %1453 = vmatmul.mubr.bf16.gmra.mrb[0].mxu0 %v1326
    %v1454 = vpop.f32.mrb[0].mxu0
    %v1455 = vadd.f32 0.0, %v1454
    %v1456 = vpop.f32.mrb[0].mxu0
    %v1457 = vpop.f32.mrb[0].mxu0
    %v1458 = vadd.f32 0.0, %v1457
    %v1459 = vpop.f32.mrb[0].mxu0
    %1460 = vmatprep.mubr.bf16.mxu0 0
    %1461 = vmatmul.mubr.bf16.gmra.mrb[0].mxu0 %v1327
    %v1462 = vpop.f32.mrb[0].mxu0
    %v1463 = vadd.f32 0.0, %v1462
    %v1464 = vpop.f32.mrb[0].mxu0
    %v1465 = vpop.f32.mrb[0].mxu0
    %v1466 = vadd.f32 0.0, %v1465
    %v1467 = vpop.f32.mrb[0].mxu0
    %1468 = vmatprep.mubr.bf16.mxu0 0
    %1469 = vmatmul.mubr.bf16.gmra.mrb[0].mxu0 %v1328
    %v1470 = vpop.f32.mrb[0].mxu0
    %v1471 = vadd.f32 0.0, %v1470
    %v1472 = vpop.f32.mrb[0].mxu0
    %v1473 = vpop.f32.mrb[0].mxu0
    %v1474 = vadd.f32 0.0, %v1473
    %v1475 = vpop.f32.mrb[0].mxu0
    %1476 = vmatprep.mubr.bf16.mxu0 0
    %1477 = vmatmul.mubr.bf16.gmra.mrb[0].mxu0 %v1329
    %v1478 = vpop.f32.mrb[0].mxu0
    %v1479 = vadd.f32 0.0, %v1478
    %v1480 = vpop.f32.mrb[0].mxu0
    %v1481 = vpop.f32.mrb[0].mxu0
    %v1482 = vadd.f32 0.0, %v1481
    %v1483 = vpop.f32.mrb[0].mxu0
    %1484 = vmatprep.mubr.bf16.mxu0 0
    %1485 = vmatmul.mubr.bf16.gmra.mrb[0].mxu0 %v1330
    %v1486 = vpop.f32.mrb[0].mxu0
    %v1487 = vadd.f32 0.0, %v1486
    %v1488 = vpop.f32.mrb[0].mxu0
    %v1489 = vpop.f32.mrb[0].mxu0
    %v1490 = vadd.f32 0.0, %v1489
    %v1491 = vpop.f32.mrb[0].mxu0
    %1492 = vmatprep.mubr.bf16.mxu0 0
    %1493 = vmatmul.mubr.bf16.gmra.mrb[0].mxu0 %v1331
    %v1494 = vpop.f32.mrb[0].mxu0
    %v1495 = vadd.f32 0.0, %v1494
    %v1496 = vpop.f32.mrb[0].mxu0
    %v1497 = vpop.f32.mrb[0].mxu0
    %v1498 = vadd.f32 0.0, %v1497
    %v1499 = vpop.f32.mrb[0].mxu0
    %1500 = vmatprep.mubr.bf16.mxu0 0
    %1501 = vmatmul.mubr.bf16.gmra.mrb[0].mxu0 %v1332
    %v1502 = vpop.f32.mrb[0].mxu0
    %v1503 = vadd.f32 0.0, %v1502
    %v1504 = vpop.f32.mrb[0].mxu0
    %v1505 = vpop.f32.mrb[0].mxu0
    %v1506 = vadd.f32 0.0, %v1505
    %v1507 = vpop.f32.mrb[0].mxu0
    %1508 = vmatprep.mubr.bf16.mxu0 0
    %1509 = vmatmul.mubr.bf16.gmra.mrb[0].mxu0 %v1333
    %v1510 = vpop.f32.mrb[0].mxu0
    %v1511 = vadd.f32 0.0, %v1510
    %v1512 = vpop.f32.mrb[0].mxu0
    %v1513 = vpop.f32.mrb[0].mxu0
    %v1514 = vadd.f32 0.0, %v1513
    %v1515 = vpop.f32.mrb[0].mxu0
    %1516 = vmatprep.mubr.bf16.mxu0 0
    %1517 = vmatmul.mubr.bf16.gmra.mrb[0].mxu0 %v1334
    %v1518 = vpop.f32.mrb[0].mxu0
    %v1519 = vadd.f32 0.0, %v1518
    %v1520 = vpop.f32.mrb[0].mxu0
    %v1521 = vpop.f32.mrb[0].mxu0
    %v1522 = vadd.f32 0.0, %v1521
    %v1523 = vpop.f32.mrb[0].mxu0
    %1524 = vmatprep.mubr.bf16.mxu0 0
    %1525 = vmatmul.mubr.bf16.gmra.mrb[0].mxu0 %v1335
    %v1526 = vpop.f32.mrb[0].mxu0
    %v1527 = vadd.f32 0.0, %v1526
    %v1528 = vpop.f32.mrb[0].mxu0
    %v1529 = vpop.f32.mrb[0].mxu0
    %v1530 = vadd.f32 0.0, %v1529
    %v1531 = vpop.f32.mrb[0].mxu0
    %1532 = vmatprep.mubr.bf16.mxu0 0
    %1533 = vmatmul.mubr.bf16.gmra.mrb[0].mxu0 %v1336
    %v1534 = vpop.f32.mrb[0].mxu0
    %v1535 = vadd.f32 0.0, %v1534
    %v1536 = vpop.f32.mrb[0].mxu0
    %v1537 = vpop.f32.mrb[0].mxu0
    %v1538 = vadd.f32 0.0, %v1537
    %v1539 = vpop.f32.mrb[0].mxu0
    %1540 = vmatprep.mubr.bf16.mxu0 0
    %1541 = vmatmul.mubr.bf16.gmra.mrb[0].mxu0 %v1337
    %v1542 = vpop.f32.mrb[0].mxu0
    %v1543 = vadd.f32 0.0, %v1542
    %v1544 = vpop.f32.mrb[0].mxu0
    %v1545 = vpop.f32.mrb[0].mxu0
    %v1546 = vadd.f32 0.0, %v1545
    %v1547 = vpop.f32.mrb[0].mxu0
    %1548 = vmatprep.mubr.bf16.mxu0 0
    %1549 = vmatmul.mubr.bf16.gmra.mrb[0].mxu0 %v1338
    %v1550 = vpop.f32.mrb[0].mxu0
    %v1551 = vadd.f32 0.0, %v1550
    %v1552 = vpop.f32.mrb[0].mxu0
    %v1553 = vpop.f32.mrb[0].mxu0
    %v1554 = vadd.f32 0.0, %v1553
    %v1555 = vpop.f32.mrb[0].mxu0
    %1556 = vmatprep.mubr.bf16.mxu0 0
    %1557 = vmatmul.mubr.bf16.gmra.mrb[0].mxu0 %v1339
    %v1558 = vpop.f32.mrb[0].mxu0
    %v1559 = vadd.f32 0.0, %v1558
    %v1560 = vpop.f32.mrb[0].mxu0
    %v1561 = vpop.f32.mrb[0].mxu0
    %v1562 = vadd.f32 0.0, %v1561
    %v1563 = vpop.f32.mrb[0].mxu0
    %1564 = vdwg.mxu0
    %v1581 = vunpack.c.l.b16 %v1308
    %v1582 = vunpack.c.l.b16 %v1309
    %v1583 = vunpack.c.l.b16 %v1310
    %v1584 = vunpack.c.l.b16 %v1311
    %v1585 = vunpack.c.l.b16 %v1312
    %v1586 = vunpack.c.l.b16 %v1313
    %v1587 = vunpack.c.l.b16 %v1314
    %v1588 = vunpack.c.l.b16 %v1315
    %v1589 = vunpack.c.l.b16 %v1316
    %v1590 = vunpack.c.l.b16 %v1317
    %v1591 = vunpack.c.l.b16 %v1318
    %v1592 = vunpack.c.l.b16 %v1319
    %v1593 = vunpack.c.l.b16 %v1320
    %v1594 = vunpack.c.l.b16 %v1321
    %v1595 = vunpack.c.l.b16 %v1322
    %v1596 = vunpack.c.l.b16 %v1323
    %v1597 = vpack.c.b16 %v1582, %v1581
    %v1598 = vpack.c.b16 %v1584, %v1583
    %v1599 = vpack.c.b16 %v1586, %v1585
    %v1600 = vpack.c.b16 %v1588, %v1587
    %v1601 = vpack.c.b16 %v1590, %v1589
    %v1602 = vpack.c.b16 %v1592, %v1591
    %v1603 = vpack.c.b16 %v1594, %v1593
    %v1604 = vpack.c.b16 %v1596, %v1595
    %1613 = vmatprep.subr.bf16.mxu0 0
    %1614 = vmatpush1.bf16.msra.mxu0 %v1597
    %1615 = vmatprep.subr.bf16.mxu0 0
    %1616 = vmatpush1.bf16.msra.mxu0 %v1598
    %1617 = vmatprep.subr.bf16.mxu0 0
    %1618 = vmatpush1.bf16.msra.mxu0 %v1599
    %1619 = vmatprep.subr.bf16.mxu0 0
    %1620 = vmatpush1.bf16.msra.mxu0 %v1600
    %1621 = vmatprep.subr.bf16.mxu0 0
    %1622 = vmatpush1.bf16.msra.mxu0 %v1601
    %1623 = vmatprep.subr.bf16.mxu0 0
    %1624 = vmatpush1.bf16.msra.mxu0 %v1602
    %1625 = vmatprep.subr.bf16.mxu0 0
    %1626 = vmatpush1.bf16.msra.mxu0 %v1603
    %1627 = vmatprep.subr.bf16.mxu0 0
    %1628 = vmatpush1.bf16.msra.mxu0 %v1604
    %1629 = vmatprep.subr.bf16.mxu0 0
    %1630 = vmatpush1.bf16.msra.mxu0 0
    %1631 = vmatprep.subr.bf16.mxu0 0
    %1632 = vmatpush1.bf16.msra.mxu0 0
    %1633 = vmatprep.subr.bf16.mxu0 0
    %1634 = vmatpush1.bf16.msra.mxu0 0
    %1635 = vmatprep.subr.bf16.mxu0 0
    %1636 = vmatpush1.bf16.msra.mxu0 0
    %1637 = vmatprep.subr.bf16.mxu0 0
    %1638 = vmatpush1.bf16.msra.mxu0 0
    %1639 = vmatprep.subr.bf16.mxu0 0
    %1640 = vmatpush1.bf16.msra.mxu0 0
    %1641 = vmatprep.subr.bf16.mxu0 0
    %1642 = vmatpush1.bf16.msra.mxu0 0
    %1643 = vmatprep.subr.bf16.mxu0 0
    %1644 = vmatpush1.bf16.msra.mxu0 0
    %1645 = vmatprep.mubr.bf16.mxu0 0
    %1646 = vmatmul.mubr.bf16.gmra.mrb[0].mxu0 %v1131
    %v1647 = vpop.f32.mrb[0].mxu0
    %v1648 = vadd.f32 %v1439, %v1647
    %v1649 = vpop.f32.mrb[0].mxu0
    %v1650 = vpop.f32.mrb[0].mxu0
    %v1651 = vadd.f32 %v1442, %v1650
    %v1652 = vpop.f32.mrb[0].mxu0
    %1653 = vmatprep.mubr.bf16.mxu0 0
    %1654 = vmatmul.mubr.bf16.gmra.mrb[0].mxu0 %v1132
    %v1655 = vpop.f32.mrb[0].mxu0
    %v1656 = vadd.f32 %v1447, %v1655
    %v1657 = vpop.f32.mrb[0].mxu0
    %v1658 = vpop.f32.mrb[0].mxu0
    %v1659 = vadd.f32 %v1450, %v1658
    %v1660 = vpop.f32.mrb[0].mxu0
    %1661 = vmatprep.mubr.bf16.mxu0 0
    %1662 = vmatmul.mubr.bf16.gmra.mrb[0].mxu0 %v1133
    %v1663 = vpop.f32.mrb[0].mxu0
    %v1664 = vadd.f32 %v1455, %v1663
    %v1665 = vpop.f32.mrb[0].mxu0
    %v1666 = vpop.f32.mrb[0].mxu0
    %v1667 = vadd.f32 %v1458, %v1666
    %v1668 = vpop.f32.mrb[0].mxu0
    %1669 = vmatprep.mubr.bf16.mxu0 0
    %1670 = vmatmul.mubr.bf16.gmra.mrb[0].mxu0 %v1134
    %v1671 = vpop.f32.mrb[0].mxu0
    %v1672 = vadd.f32 %v1463, %v1671
    %v1673 = vpop.f32.mrb[0].mxu0
    %v1674 = vpop.f32.mrb[0].mxu0
    %v1675 = vadd.f32 %v1466, %v1674
    %v1676 = vpop.f32.mrb[0].mxu0
    %1677 = vmatprep.mubr.bf16.mxu0 0
    %1678 = vmatmul.mubr.bf16.gmra.mrb[0].mxu0 %v1135
    %v1679 = vpop.f32.mrb[0].mxu0
    %v1680 = vadd.f32 %v1471, %v1679
    %v1681 = vpop.f32.mrb[0].mxu0
    %v1682 = vpop.f32.mrb[0].mxu0
    %v1683 = vadd.f32 %v1474, %v1682
    %v1684 = vpop.f32.mrb[0].mxu0
    %1685 = vmatprep.mubr.bf16.mxu0 0
    %1686 = vmatmul.mubr.bf16.gmra.mrb[0].mxu0 %v1136
    %v1687 = vpop.f32.mrb[0].mxu0
    %v1688 = vadd.f32 %v1479, %v1687
    %v1689 = vpop.f32.mrb[0].mxu0
    %v1690 = vpop.f32.mrb[0].mxu0
    %v1691 = vadd.f32 %v1482, %v1690
    %v1692 = vpop.f32.mrb[0].mxu0
    %1693 = vmatprep.mubr.bf16.mxu0 0
    %1694 = vmatmul.mubr.bf16.gmra.mrb[0].mxu0 %v1137
    %v1695 = vpop.f32.mrb[0].mxu0
    %v1696 = vadd.f32 %v1487, %v1695
    %v1697 = vpop.f32.mrb[0].mxu0
    %v1698 = vpop.f32.mrb[0].mxu0
    %v1699 = vadd.f32 %v1490, %v1698
    %v1700 = vpop.f32.mrb[0].mxu0
    %1701 = vmatprep.mubr.bf16.mxu0 0
    %1702 = vmatmul.mubr.bf16.gmra.mrb[0].mxu0 %v1138
    %v1703 = vpop.f32.mrb[0].mxu0
    %v1704 = vadd.f32 %v1495, %v1703
    %v1705 = vpop.f32.mrb[0].mxu0
    %v1706 = vpop.f32.mrb[0].mxu0
    %v1707 = vadd.f32 %v1498, %v1706
    %v1708 = vpop.f32.mrb[0].mxu0
    %1709 = vmatprep.mubr.bf16.mxu0 0
    %1710 = vmatmul.mubr.bf16.gmra.mrb[0].mxu0 %v1139
    %v1711 = vpop.f32.mrb[0].mxu0
    %v1712 = vadd.f32 %v1503, %v1711
    %v1713 = vpop.f32.mrb[0].mxu0
    %v1714 = vpop.f32.mrb[0].mxu0
    %v1715 = vadd.f32 %v1506, %v1714
    %v1716 = vpop.f32.mrb[0].mxu0
    %1717 = vmatprep.mubr.bf16.mxu0 0
    %1718 = vmatmul.mubr.bf16.gmra.mrb[0].mxu0 %v1140
    %v1719 = vpop.f32.mrb[0].mxu0
    %v1720 = vadd.f32 %v1511, %v1719
    %v1721 = vpop.f32.mrb[0].mxu0
    %v1722 = vpop.f32.mrb[0].mxu0
    %v1723 = vadd.f32 %v1514, %v1722
    %v1724 = vpop.f32.mrb[0].mxu0
    %1725 = vmatprep.mubr.bf16.mxu0 0
    %1726 = vmatmul.mubr.bf16.gmra.mrb[0].mxu0 %v1141
    %v1727 = vpop.f32.mrb[0].mxu0
    %v1728 = vadd.f32 %v1519, %v1727
    %v1729 = vpop.f32.mrb[0].mxu0
    %v1730 = vpop.f32.mrb[0].mxu0
    %v1731 = vadd.f32 %v1522, %v1730
    %v1732 = vpop.f32.mrb[0].mxu0
    %1733 = vmatprep.mubr.bf16.mxu0 0
    %1734 = vmatmul.mubr.bf16.gmra.mrb[0].mxu0 %v1142
    %v1735 = vpop.f32.mrb[0].mxu0
    %v1736 = vadd.f32 %v1527, %v1735
    %v1737 = vpop.f32.mrb[0].mxu0
    %v1738 = vpop.f32.mrb[0].mxu0
    %v1739 = vadd.f32 %v1530, %v1738
    %v1740 = vpop.f32.mrb[0].mxu0
    %1741 = vmatprep.mubr.bf16.mxu0 0
    %1742 = vmatmul.mubr.bf16.gmra.mrb[0].mxu0 %v1143
    %v1743 = vpop.f32.mrb[0].mxu0
    %v1744 = vadd.f32 %v1535, %v1743
    %v1745 = vpop.f32.mrb[0].mxu0
    %v1746 = vpop.f32.mrb[0].mxu0
    %v1747 = vadd.f32 %v1538, %v1746
    %v1748 = vpop.f32.mrb[0].mxu0
    %1749 = vmatprep.mubr.bf16.mxu0 0
    %1750 = vmatmul.mubr.bf16.gmra.mrb[0].mxu0 %v1144
    %v1751 = vpop.f32.mrb[0].mxu0
    %v1752 = vadd.f32 %v1543, %v1751
    %v1753 = vpop.f32.mrb[0].mxu0
    %v1754 = vpop.f32.mrb[0].mxu0
    %v1755 = vadd.f32 %v1546, %v1754
    %v1756 = vpop.f32.mrb[0].mxu0
    %1757 = vmatprep.mubr.bf16.mxu0 0
    %1758 = vmatmul.mubr.bf16.gmra.mrb[0].mxu0 %v1145
    %v1759 = vpop.f32.mrb[0].mxu0
    %v1760 = vadd.f32 %v1551, %v1759
    %v1761 = vpop.f32.mrb[0].mxu0
    %v1762 = vpop.f32.mrb[0].mxu0
    %v1763 = vadd.f32 %v1554, %v1762
    %v1764 = vpop.f32.mrb[0].mxu0
    %1765 = vmatprep.mubr.bf16.mxu0 0
    %1766 = vmatmul.mubr.bf16.gmra.mrb[0].mxu0 %v1146
    %v1767 = vpop.f32.mrb[0].mxu0
    %v1768 = vadd.f32 %v1559, %v1767
    %v1769 = vpop.f32.mrb[0].mxu0
    %v1770 = vpop.f32.mrb[0].mxu0
    %v1771 = vadd.f32 %v1562, %v1770
    %v1772 = vpop.f32.mrb[0].mxu0
    %1773 = vdwg.mxu0
    %v1774 = vld [vmem:[%s7] sm:$0x1]
    %v1776 = vlaneseq
    %v1777 = vshrl.u32 %v1776, 7
    %v1778 = vsub.s32 0, %v1777
    %v1779 = vrot.slane %v1774, %v1778
    %v1781 = vadd.f32 %v1648, %v1779
    %v1782 = vadd.f32 %v1651, %v1779
    %v1783 = vadd.f32 %v1656, %v1779
    %v1784 = vadd.f32 %v1659, %v1779
    %v1785 = vadd.f32 %v1664, %v1779
    %v1786 = vadd.f32 %v1667, %v1779
    %v1787 = vadd.f32 %v1672, %v1779
    %v1788 = vadd.f32 %v1675, %v1779
    %v1789 = vadd.f32 %v1680, %v1779
    %v1790 = vadd.f32 %v1683, %v1779
    %v1791 = vadd.f32 %v1688, %v1779
    %v1792 = vadd.f32 %v1691, %v1779
    %v1793 = vadd.f32 %v1696, %v1779
    %v1794 = vadd.f32 %v1699, %v1779
    %v1795 = vadd.f32 %v1704, %v1779
    %v1796 = vadd.f32 %v1707, %v1779
    %v1797 = vadd.f32 %v1712, %v1779
    %v1798 = vadd.f32 %v1715, %v1779
    %v1799 = vadd.f32 %v1720, %v1779
    %v1800 = vadd.f32 %v1723, %v1779
    %v1801 = vadd.f32 %v1728, %v1779
    %v1802 = vadd.f32 %v1731, %v1779
    %v1803 = vadd.f32 %v1736, %v1779
    %v1804 = vadd.f32 %v1739, %v1779
    %v1805 = vadd.f32 %v1744, %v1779
    %v1806 = vadd.f32 %v1747, %v1779
    %v1807 = vadd.f32 %v1752, %v1779
    %v1808 = vadd.f32 %v1755, %v1779
    %v1809 = vadd.f32 %v1760, %v1779
    %v1810 = vadd.f32 %v1763, %v1779
    %v1811 = vadd.f32 %v1768, %v1779
    %v1812 = vadd.f32 %v1771, %v1779
    %1813 = vst [vmem:[#allocation13] sm:$0xff] %v1781
    %1814 = vst [vmem:[#allocation13 + $0x8] sm:$0xff] %v1782
    %1815 = vst [vmem:[#allocation13 + $0x10] sm:$0xff] %v1783
    %1816 = vst [vmem:[#allocation13 + $0x18] sm:$0xff] %v1784
    %1817 = vst [vmem:[#allocation13 + $0x20] sm:$0xff] %v1785
    %1818 = vst [vmem:[#allocation13 + $0x28] sm:$0xff] %v1786
    %1819 = vst [vmem:[#allocation13 + $0x30] sm:$0xff] %v1787
    %1820 = vst [vmem:[#allocation13 + $0x38] sm:$0xff] %v1788
    %1821 = vst [vmem:[#allocation13 + $0x40] sm:$0xff] %v1789
    %1822 = vst [vmem:[#allocation13 + $0x48] sm:$0xff] %v1790
    %1823 = vst [vmem:[#allocation13 + $0x50] sm:$0xff] %v1791
    %1824 = vst [vmem:[#allocation13 + $0x58] sm:$0xff] %v1792
    %1825 = vst [vmem:[#allocation13 + $0x60] sm:$0xff] %v1793
    %1826 = vst [vmem:[#allocation13 + $0x68] sm:$0xff] %v1794
    %1827 = vst [vmem:[#allocation13 + $0x70] sm:$0xff] %v1795
    %1828 = vst [vmem:[#allocation13 + $0x78] sm:$0xff] %v1796
    %1829 = vst [vmem:[#allocation13 + $0x80] sm:$0xff] %v1797
    %1830 = vst [vmem:[#allocation13 + $0x88] sm:$0xff] %v1798
    %1831 = vst [vmem:[#allocation13 + $0x90] sm:$0xff] %v1799
    %1832 = vst [vmem:[#allocation13 + $0x98] sm:$0xff] %v1800
    %1833 = vst [vmem:[#allocation13 + $0xa0] sm:$0xff] %v1801
    %1834 = vst [vmem:[#allocation13 + $0xa8] sm:$0xff] %v1802
    %1835 = vst [vmem:[#allocation13 + $0xb0] sm:$0xff] %v1803
    %1836 = vst [vmem:[#allocation13 + $0xb8] sm:$0xff] %v1804
    %1837 = vst [vmem:[#allocation13 + $0xc0] sm:$0xff] %v1805
    %1838 = vst [vmem:[#allocation13 + $0xc8] sm:$0xff] %v1806
    %1839 = vst [vmem:[#allocation13 + $0xd0] sm:$0xff] %v1807
    %1840 = vst [vmem:[#allocation13 + $0xd8] sm:$0xff] %v1808
    %1841 = vst [vmem:[#allocation13 + $0xe0] sm:$0xff] %v1809
    %1842 = vst [vmem:[#allocation13 + $0xe8] sm:$0xff] %v1810
    %1843 = vst [vmem:[#allocation13 + $0xf0] sm:$0xff] %v1811
    %1844 = vst [vmem:[#allocation13 + $0xf8] sm:$0xff] %v1812
    // Predicated region
    $region58: #{p1gcn_forward_padded.1} parent=1 // pred_check
      _
    $region59: #{p1gcn_forward_padded.1} parent=1 // pred_check_branch
      %1846 = sbr.rel (0) target = $region61
    $region60: #{p1gcn_forward_padded.1} parent=1 // pred_region
      %s1848 = ssub.s32 4096, 4096
      %1849 = vsyncadd [#allocation4], %s1848
      %s1850 = sshll.u32 [#allocation13], 4
      %s1851 = int_to_ptr.vmem [resolvable:$true] %s1850
      %1856 = dma.vmem_to_hbm [thread:$0]  %s1851, 4096, %s8, [#allocation4], 128, 128, 8
    $region61: #{p1gcn_forward_padded.1} parent=1 // pred_fallthru
      _
    // Predicated region
    $region62: #{p1gcn_forward_padded.1} parent=1 // pred_check
      _
    $region63: #{p1gcn_forward_padded.1} parent=1 // pred_check_branch
      %1858 = sbr.rel (0) target = $region65
    $region64: #{p1gcn_forward_padded.1} parent=1 // pred_region
      %1859 = dma.done [#allocation4], 4096
    $region65: #{p1gcn_forward_padded.1} parent=1 // pred_fallthru
      _
    %1860 = vsyncpa [#allocation3], 1
    %1861 = vsyncpa [#allocation6], 1
    %1862 = vsyncpa [#allocation9], 1
    %1863 = vsyncpa [#allocation12], 1
    %1864 = vsyncpa [#allocation4], 1

</llo_original>
